<compile_context>
chip_gen: v7x
topology: tpu7x:2x2x1
jax: 0.10.0
libtpu: 0.0.40
codegen_flags: <defaults>
</compile_context>

<pallas_src>
import functools

import jax
import jax.numpy as jnp
import numpy as np
from jax.experimental import pallas as pl
from jax.experimental.pallas import tpu as pltpu


# ------------------------------ fused kernel ---------------------------------
def _fused_convnet_kernel(x_ref, *refs, layer_meta, B_blk, T_pad, pad_a,
                          stripe_w, pooling):
    """Fused causal-TCN forward for B_blk samples striped along the lane axis.

    x_ref : (B_blk, C_in0, T_pad)   input block, compute dtype (bf16 or f32)
    refs  : w_0..w_{L-1}   (C_out_l, K_l*C_in_pad_l)  folded weights, compute dt
            b_0..b_{L-1}   (C_out_l, 1)               float32
            out_ref        (B_blk, T_pad) if pooling else (B_blk, C_last, T_pad)
            act            (c_max, B_blk*stripe_w)        VMEM scratch
            stk            (stack_rows_max, B_blk*stripe_w) VMEM scratch
    """
    L = len(layer_meta)
    w_refs = refs[:L]
    b_refs = refs[L:2 * L]
    out_ref = refs[2 * L]
    act = refs[2 * L + 1]
    stk = refs[2 * L + 2]

    full_w = B_blk * stripe_w

    # Zero both scratches once per grid step: establishes the causal-pad zeros
    # of every stripe, the sublane-pad rows of the stacked matrix, and the
    # T-padding tail (also guards against NaNs in uninitialized VMEM).
    act[...] = jnp.zeros_like(act)
    stk[...] = jnp.zeros_like(stk)

    # Lane mask: True on data columns of each stripe, False on its causal-pad
    # columns. Re-applied to every layer output so pad columns stay exactly 0.
    if pad_a > 0:
        lane = jax.lax.broadcasted_iota(jnp.int32, (1, full_w), 1)
        data_mask = (lane % stripe_w) >= pad_a
    else:
        data_mask = None

    # Stage the B_blk input samples into their stripes (lane-aligned stores:
    # both pad_a and stripe_w are multiples of 128).
    c_in0 = layer_meta[0][2]
    for j in range(B_blk):
        act[0:c_in0, pl.ds(j * stripe_w + pad_a, T_pad)] = x_ref[j]

    for l, (K, dil, c_in, c_out, c_in_pad) in enumerate(layer_meta):
        # --- build the stacked-shift matrix --------------------------------
        # Row-block k holds the activation shifted right by (K-1-k)*dil lanes,
        # so column c carries x[:, c - shift]. The first `shift` columns of a
        # row-block are stale; they only feed pad-region outputs which the
        # mask discards (shift <= max_pad <= pad_a keeps valid reads inside
        # each sample's own stripe).
        for k in range(K):
            shift = (K - 1 - k) * dil                     # static Python int
            r0 = k * c_in_pad
            if shift == 0:
                stk[r0:r0 + c_in, :] = act[0:c_in, :]
            else:
                stk[r0:r0 + c_in, shift:full_w] = act[0:c_in, 0:full_w - shift]

        # --- ONE MXU matmul per layer (f32 accumulation) + bias + ReLU -----
        rows = K * c_in_pad
        acc = jnp.dot(w_refs[l][...], stk[0:rows, :],
                      preferred_element_type=jnp.float32)
        acc = jnp.maximum(acc + b_refs[l][...], 0.0)
        # TODO(synk): nn.Dropout(dropout) is identity here (p=0 / eval mode).

        if l == L - 1:
            # Final layer: extract each sample's data columns (aligned slices).
            if pooling:
                # MaxPool1d(C_last) == max over channels (sublane reduction).
                pooled = jnp.max(acc, axis=0, keepdims=True)      # (1, full_w)
                for j in range(B_blk):
                    a0 = j * stripe_w + pad_a
                    out_ref[j:j + 1, :] = pooled[:, a0:a0 + T_pad].astype(
                        out_ref.dtype)
            else:
                for j in range(B_blk):
                    a0 = j * stripe_w + pad_a
                    out_ref[j] = acc[:, a0:a0 + T_pad].astype(out_ref.dtype)
        else:
            # Re-zero pad columns, then overwrite the activation buffer in
            # place with one full-width lane-dense store (the stacked matrix
            # already holds everything this layer's matmul needed).
            if data_mask is not None:
                acc = jnp.where(data_mask, acc, 0.0)
            # NOTE: intermediate activations round-trip through compute_dtype
            # (bf16 on the production path) — documented precision trade-off.
            act[0:c_out, :] = acc.astype(act.dtype)


# --------------------------------- wrapper ------------------------------------
def convnet_forward(x, params, dilation=2, pooling=True,
                    compute_dtype=jnp.bfloat16, block_b=8):
    """x: (B, T, num_inputs) -> (B, T, 1) if pooling else (B, T, C_last)."""
    B, T, c_in0 = x.shape

    def rup(v, m):
        return ((v + m - 1) // m) * m

    layer_meta = []
    max_pad = 0
    for i, (w, _) in enumerate(params):
        K, c_in, c_out = w.shape
        dil = dilation ** i
        layer_meta.append((K, dil, c_in, c_out, rup(c_in, 8)))
        max_pad = max(max_pad, (K - 1) * dil)
    c_last = layer_meta[-1][3]
    c_max = max([c_in0] + [m[3] for m in layer_meta])
    stack_rows_max = max(m[0] * m[4] for m in layer_meta)

    # 128-lane alignment of pad and T (unmasked staging / stores / extraction).
    pad_a = rup(max_pad, 128) if max_pad > 0 else 0
    T_pad = rup(T, 128)
    stripe_w = pad_a + T_pad

    # Batch blocking: B_blk samples per grid step, striped along lanes.
    # B_blk is a multiple of 8 so the pooled (B_blk, T_pad) output block keeps
    # sublane-legal tiling.
    B_blk = max(8, rup(block_b, 8))
    B_pad = rup(max(B, B_blk), B_blk)
    full_w = B_blk * stripe_w

    # Host-side layout prep (transpose+cast+pad fuse into one XLA copy).
    # TODO(synk): on v5e this relayout pass could move into the kernel
    # (native (B,T,C) block + in-kernel transpose) to save one HBM pass.
    x_ncl = jnp.transpose(x, (0, 2, 1)).astype(compute_dtype)       # (B, C, T)
    x_ncl = jnp.pad(x_ncl, ((0, B_pad - B), (0, 0), (0, T_pad - T)))

    w_in, b_in = [], []
    for (w, b), (K, dil, c_in, c_out, c_in_pad) in zip(params, layer_meta):
        wf = jnp.transpose(w, (2, 0, 1))                   # (c_out, K, c_in)
        wf = jnp.pad(wf, ((0, 0), (0, 0), (0, c_in_pad - c_in)))
        w_in.append(wf.reshape(c_out, K * c_in_pad).astype(compute_dtype))
        b_in.append(b.reshape(-1, 1).astype(jnp.float32))

    # VMEM budget (scratch + double-buffered I/O blocks + resident weights).
    itemsize = jnp.dtype(compute_dtype).itemsize
    out_ch = 1 if pooling else c_last
    est = (c_max + stack_rows_max) * full_w * itemsize
    est += 2 * B_blk * c_in0 * T_pad * itemsize
    est += 2 * B_blk * out_ch * T_pad * 4
    est += 2 * sum(int(np.prod(w.shape)) * itemsize for w in w_in)
    est += 2 * sum(int(np.prod(b.shape)) * 4 for b in b_in)
    # v7x-conservative ceiling. TODO(synk): T-tile grid axis with per-layer
    # halo carry for long sequences instead of whole-sequence scratch.
    assert est <= 24 * 2**20, (
        f"VMEM estimate {est/2**20:.1f} MiB exceeds budget; tile T.")

    kern = functools.partial(_fused_convnet_kernel,
                             layer_meta=tuple(layer_meta), B_blk=B_blk,
                             T_pad=T_pad, pad_a=pad_a, stripe_w=stripe_w,
                             pooling=pooling)

    in_specs = [pl.BlockSpec((B_blk, c_in0, T_pad), lambda g: (g, 0, 0))]
    in_specs += [pl.BlockSpec(w.shape, lambda g: (0, 0)) for w in w_in]
    in_specs += [pl.BlockSpec(b.shape, lambda g: (0, 0)) for b in b_in]

    if pooling:
        out_shape = jax.ShapeDtypeStruct((B_pad, T_pad), jnp.float32)
        out_spec = pl.BlockSpec((B_blk, T_pad), lambda g: (g, 0))
    else:
        out_shape = jax.ShapeDtypeStruct((B_pad, c_last, T_pad), jnp.float32)
        out_spec = pl.BlockSpec((B_blk, c_last, T_pad), lambda g: (g, 0, 0))

    compiler_params = pltpu.CompilerParams(
        dimension_semantics=("parallel",),
        vmem_limit_bytes=(int(min(96 * 2**20, 2 * est))
                          if est > 12 * 2**20 else None))

    out = pl.pallas_call(
        kern,
        out_shape=out_shape,
        grid=(B_pad // B_blk,),
        in_specs=in_specs,
        out_specs=out_spec,
        scratch_shapes=[pltpu.VMEM((c_max, full_w), compute_dtype),
                        pltpu.VMEM((stack_rows_max, full_w), compute_dtype)],
        compiler_params=compiler_params,
    )(x_ncl, *w_in, *b_in)

    # Back to the module's (B, T, 1) / (B, T, C_last) output layout.
    if pooling:
        return out[:B, :T][..., None]
    return jnp.transpose(out, (0, 2, 1))[:B, :T, :]


# --------------------------------- params -------------------------------------
def init_convnet_params(key, num_inputs, num_channels, kernel_sizes):
    """Deterministic Conv1d-style init: U(-1/sqrt(fan_in), 1/sqrt(fan_in))."""
    params = []
    for i, ks in enumerate(kernel_sizes):
        c_in = num_inputs if i == 0 else num_channels[i - 1]
        c_out = num_channels[i]
        key, wk, bk = jax.random.split(key, 3)
        bound = 1.0 / float(np.sqrt(c_in * ks))
        w = jax.random.uniform(wk, (ks, c_in, c_out), jnp.float32, -bound, bound)
        b = jax.random.uniform(bk, (c_out,), jnp.float32, -bound, bound)
        params.append((w, b))
    return params


# ---------------------------- pure-JAX reference ------------------------------
def convnet_reference(x, params, dilation=2, pooling=True):
    out = jnp.transpose(x, (0, 2, 1))               # (B, C, T)  == PyTorch NCL
    for i, (w, b) in enumerate(params):
        d = dilation ** i
        K = w.shape[0]
        p = (K - 1) * d
        w_oik = jnp.transpose(w, (2, 1, 0))         # (C_out, C_in, K)
        out = jax.lax.conv_general_dilated(
            out, w_oik, window_strides=(1,), padding=[(p, p)],
            rhs_dilation=(d,), dimension_numbers=("NCH", "OIH", "NCH"))
        if p > 0:                                    # Chomp1d
            out = out[:, :, : out.shape[2] - p]
        out = jnp.maximum(out + b[None, :, None], 0.0)
    out = jnp.transpose(out, (0, 2, 1))             # (B, T, C_last)
    if pooling:
        out = jnp.max(out, axis=-1, keepdims=True)  # MaxPool1d(C_last)
    return out


if __name__ == "__main__":
    key = jax.random.PRNGKey(0)

    # Small shapes consistent with ConvNet(num_inputs, num_channels, kernel_sizes)
    B, T, num_inputs = 2, 16, 4
    num_channels = [8, 8]
    kernel_sizes = [3, 3]
    dilation = 2

    key, xk = jax.random.split(key)
    x = jax.random.normal(xk, (B, T, num_inputs), jnp.float32)
    params = init_convnet_params(key, num_inputs, num_channels, kernel_sizes)

    ref_pool = convnet_reference(x, params, dilation=dilation, pooling=True)
    ref_nopool = convnet_reference(x, params, dilation=dilation, pooling=False)

    # 1) f32 path: tight correctness check of the fused kernel math.
    out_f32 = jax.block_until_ready(
        convnet_forward(x, params, dilation=dilation, pooling=True,
                        compute_dtype=jnp.float32))
    np.testing.assert_allclose(np.asarray(out_f32), np.asarray(ref_pool),
                               rtol=1e-4, atol=1e-4)

    # 2) f32 path without pooling (module's pooling=False mode).
    out_np = jax.block_until_ready(
        convnet_forward(x, params, dilation=dilation, pooling=False,
                        compute_dtype=jnp.float32))
    np.testing.assert_allclose(np.asarray(out_np), np.asarray(ref_nopool),
                               rtol=1e-4, atol=1e-4)

    # 3) bf16-MXU production path: loosened tolerance (f32 accumulation).
    out_bf16 = jax.block_until_ready(
        convnet_forward(x, params, dilation=dilation, pooling=True,
                        compute_dtype=jnp.bfloat16))
    np.testing.assert_allclose(np.asarray(out_bf16), np.asarray(ref_pool),
                               rtol=5e-2, atol=5e-2)

    assert out_f32.shape == (B, T, 1)
    assert out_bf16.shape == (B, T, 1)
    assert out_np.shape == (B, T, num_channels[-1])

    print("KERNEL_OK")
</pallas_src>

<mosaic_0001>
module attributes {stable_mosaic.version = 11 : i64} {
  func.func @_fused_convnet_kernel(%arg0: i32, %arg1: memref<8x4x128xf32, #tpu.memory_space<vmem>>, %arg2: memref<8x24xf32, #tpu.memory_space<vmem>>, %arg3: memref<8x24xf32, #tpu.memory_space<vmem>>, %arg4: memref<8x1xf32, #tpu.memory_space<vmem>>, %arg5: memref<8x1xf32, #tpu.memory_space<vmem>>, %arg6: memref<8x128xf32, #tpu.memory_space<vmem>>, %arg7: memref<8x2048xf32, #tpu.memory_space<vmem>>, %arg8: memref<24x2048xf32, #tpu.memory_space<vmem>>) attributes {dimension_semantics = [#tpu.dimension_semantics<parallel>], iteration_bounds = array<i64: 1>, scalar_prefetch = 0 : i64, scratch_operands = 2 : i64, tpu.core_type = #tpu.core_type<tc>, window_params = [{transform_indices = @transform_0, window_bounds = array<i64: 8, 4, 128>}, {pipeline_mode = #tpu.pipeline_mode<synchronous>, transform_indices = @transform_1, window_bounds = array<i64: 8, 24>}, {pipeline_mode = #tpu.pipeline_mode<synchronous>, transform_indices = @transform_2, window_bounds = array<i64: 8, 24>}, {pipeline_mode = #tpu.pipeline_mode<synchronous>, transform_indices = @transform_3, window_bounds = array<i64: 8, 1>}, {pipeline_mode = #tpu.pipeline_mode<synchronous>, transform_indices = @transform_4, window_bounds = array<i64: 8, 1>}, {transform_indices = @transform_5, window_bounds = array<i64: 8, 128>}]} {
    %cst = arith.constant 0.000000e+00 : f32
    %0 = vector.broadcast %cst : f32 to vector<8x2048xf32>
    %c0 = arith.constant 0 : index
    %c0_0 = arith.constant 0 : index
    %1 = vector.load %arg7[%c0, %c0_0] : memref<8x2048xf32, #tpu.memory_space<vmem>>, vector<8x2048xf32>
    tpu.vector_store %arg7[%c0, %c0_0], %0 {strides = array<i32>} : memref<8x2048xf32, #tpu.memory_space<vmem>>, vector<8x2048xf32>,
    %cst_1 = arith.constant 0.000000e+00 : f32
    %2 = vector.broadcast %cst_1 : f32 to vector<24x2048xf32>
    %c0_2 = arith.constant 0 : index
    %c0_3 = arith.constant 0 : index
    %3 = vector.load %arg8[%c0_2, %c0_3] : memref<24x2048xf32, #tpu.memory_space<vmem>>, vector<24x2048xf32>
    tpu.vector_store %arg8[%c0_2, %c0_3], %2 {strides = array<i32>} : memref<24x2048xf32, #tpu.memory_space<vmem>>, vector<24x2048xf32>,
    %4 = tpu.iota {dimensions = array<i32: 1>} : vector<1x2048xi32>
    %c256_i32 = arith.constant 256 : i32
    %c0_i32 = arith.constant 0 : i32
    %5 = arith.cmpi eq, %c256_i32, %c0_i32 : i32
    %c1_i32 = arith.constant 1 : i32
    %6 = arith.select %5, %c1_i32, %c256_i32 : i32
    %7 = vector.broadcast %6 : i32 to vector<1x2048xi32>
    %8 = arith.remsi %4, %7 : vector<1x2048xi32>
    %c0_i32_4 = arith.constant 0 : i32
    %9 = vector.broadcast %c0_i32_4 : i32 to vector<1x2048xi32>
    %10 = arith.cmpi ne, %8, %9 : vector<1x2048xi32>
    %c0_i32_5 = arith.constant 0 : i32
    %11 = vector.broadcast %c0_i32_5 : i32 to vector<1x2048xi32>
    %12 = arith.cmpi slt, %8, %11 : vector<1x2048xi32>
    %c0_i32_6 = arith.constant 0 : i32
    %13 = arith.cmpi slt, %6, %c0_i32_6 : i32
    %14 = vector.broadcast %13 : i1 to vector<1x2048xi1>
    %15 = vector.broadcast %14 : vector<1x2048xi1> to vector<1x2048xi1>
    %16 = arith.xori %12, %15 : vector<1x2048xi1>
    %17 = arith.andi %16, %10 : vector<1x2048xi1>
    %18 = vector.broadcast %6 : i32 to vector<1x2048xi32>
    %19 = arith.addi %8, %18 : vector<1x2048xi32>
    %20 = arith.select %17, %19, %8 : vector<1x2048xi1>, vector<1x2048xi32>
    %c128_i32 = arith.constant 128 : i32
    %21 = vector.broadcast %c128_i32 : i32 to vector<1x2048xi32>
    %22 = arith.cmpi sge, %20, %21 : vector<1x2048xi32>
    %c0_7 = arith.constant 0 : index
    %c0_8 = arith.constant 0 : index
    %c0_9 = arith.constant 0 : index
    %23 = vector.load %arg1[%c0_7, %c0_8, %c0_9] : memref<8x4x128xf32, #tpu.memory_space<vmem>>, vector<1x4x128xf32>
    %24 = vector.shape_cast %23 : vector<1x4x128xf32> to vector<4x128xf32>
    %c0_10 = arith.constant 0 : index
    %c128 = arith.constant 128 : index
    %25 = vector.load %arg7[%c0_10, %c128] : memref<8x2048xf32, #tpu.memory_space<vmem>>, vector<4x128xf32>
    tpu.vector_store %arg7[%c0_10, %c128], %24 {strides = array<i32>} : memref<8x2048xf32, #tpu.memory_space<vmem>>, vector<4x128xf32>,
    %c1 = arith.constant 1 : index
    %c0_11 = arith.constant 0 : index
    %c0_12 = arith.constant 0 : index
    %26 = vector.load %arg1[%c1, %c0_11, %c0_12] : memref<8x4x128xf32, #tpu.memory_space<vmem>>, vector<1x4x128xf32>
    %27 = vector.shape_cast %26 : vector<1x4x128xf32> to vector<4x128xf32>
    %c0_13 = arith.constant 0 : index
    %c384 = arith.constant 384 : index
    %28 = vector.load %arg7[%c0_13, %c384] : memref<8x2048xf32, #tpu.memory_space<vmem>>, vector<4x128xf32>
    tpu.vector_store %arg7[%c0_13, %c384], %27 {strides = array<i32>} : memref<8x2048xf32, #tpu.memory_space<vmem>>, vector<4x128xf32>,
    %c2 = arith.constant 2 : index
    %c0_14 = arith.constant 0 : index
    %c0_15 = arith.constant 0 : index
    %29 = vector.load %arg1[%c2, %c0_14, %c0_15] : memref<8x4x128xf32, #tpu.memory_space<vmem>>, vector<1x4x128xf32>
    %30 = vector.shape_cast %29 : vector<1x4x128xf32> to vector<4x128xf32>
    %c0_16 = arith.constant 0 : index
    %c640 = arith.constant 640 : index
    %31 = vector.load %arg7[%c0_16, %c640] : memref<8x2048xf32, #tpu.memory_space<vmem>>, vector<4x128xf32>
    tpu.vector_store %arg7[%c0_16, %c640], %30 {strides = array<i32>} : memref<8x2048xf32, #tpu.memory_space<vmem>>, vector<4x128xf32>,
    %c3 = arith.constant 3 : index
    %c0_17 = arith.constant 0 : index
    %c0_18 = arith.constant 0 : index
    %32 = vector.load %arg1[%c3, %c0_17, %c0_18] : memref<8x4x128xf32, #tpu.memory_space<vmem>>, vector<1x4x128xf32>
    %33 = vector.shape_cast %32 : vector<1x4x128xf32> to vector<4x128xf32>
    %c0_19 = arith.constant 0 : index
    %c896 = arith.constant 896 : index
    %34 = vector.load %arg7[%c0_19, %c896] : memref<8x2048xf32, #tpu.memory_space<vmem>>, vector<4x128xf32>
    tpu.vector_store %arg7[%c0_19, %c896], %33 {strides = array<i32>} : memref<8x2048xf32, #tpu.memory_space<vmem>>, vector<4x128xf32>,
    %c4 = arith.constant 4 : index
    %c0_20 = arith.constant 0 : index
    %c0_21 = arith.constant 0 : index
    %35 = vector.load %arg1[%c4, %c0_20, %c0_21] : memref<8x4x128xf32, #tpu.memory_space<vmem>>, vector<1x4x128xf32>
    %36 = vector.shape_cast %35 : vector<1x4x128xf32> to vector<4x128xf32>
    %c0_22 = arith.constant 0 : index
    %c1152 = arith.constant 1152 : index
    %37 = vector.load %arg7[%c0_22, %c1152] : memref<8x2048xf32, #tpu.memory_space<vmem>>, vector<4x128xf32>
    tpu.vector_store %arg7[%c0_22, %c1152], %36 {strides = array<i32>} : memref<8x2048xf32, #tpu.memory_space<vmem>>, vector<4x128xf32>,
    %c5 = arith.constant 5 : index
    %c0_23 = arith.constant 0 : index
    %c0_24 = arith.constant 0 : index
    %38 = vector.load %arg1[%c5, %c0_23, %c0_24] : memref<8x4x128xf32, #tpu.memory_space<vmem>>, vector<1x4x128xf32>
    %39 = vector.shape_cast %38 : vector<1x4x128xf32> to vector<4x128xf32>
    %c0_25 = arith.constant 0 : index
    %c1408 = arith.constant 1408 : index
    %40 = vector.load %arg7[%c0_25, %c1408] : memref<8x2048xf32, #tpu.memory_space<vmem>>, vector<4x128xf32>
    tpu.vector_store %arg7[%c0_25, %c1408], %39 {strides = array<i32>} : memref<8x2048xf32, #tpu.memory_space<vmem>>, vector<4x128xf32>,
    %c6 = arith.constant 6 : index
    %c0_26 = arith.constant 0 : index
    %c0_27 = arith.constant 0 : index
    %41 = vector.load %arg1[%c6, %c0_26, %c0_27] : memref<8x4x128xf32, #tpu.memory_space<vmem>>, vector<1x4x128xf32>
    %42 = vector.shape_cast %41 : vector<1x4x128xf32> to vector<4x128xf32>
    %c0_28 = arith.constant 0 : index
    %c1664 = arith.constant 1664 : index
    %43 = vector.load %arg7[%c0_28, %c1664] : memref<8x2048xf32, #tpu.memory_space<vmem>>, vector<4x128xf32>
    tpu.vector_store %arg7[%c0_28, %c1664], %42 {strides = array<i32>} : memref<8x2048xf32, #tpu.memory_space<vmem>>, vector<4x128xf32>,
    %c7 = arith.constant 7 : index
    %c0_29 = arith.constant 0 : index
    %c0_30 = arith.constant 0 : index
    %44 = vector.load %arg1[%c7, %c0_29, %c0_30] : memref<8x4x128xf32, #tpu.memory_space<vmem>>, vector<1x4x128xf32>
    %45 = vector.shape_cast %44 : vector<1x4x128xf32> to vector<4x128xf32>
    %c0_31 = arith.constant 0 : index
    %c1920 = arith.constant 1920 : index
    %46 = vector.load %arg7[%c0_31, %c1920] : memref<8x2048xf32, #tpu.memory_space<vmem>>, vector<4x128xf32>
    tpu.vector_store %arg7[%c0_31, %c1920], %45 {strides = array<i32>} : memref<8x2048xf32, #tpu.memory_space<vmem>>, vector<4x128xf32>,
    %c0_32 = arith.constant 0 : index
    %c0_33 = arith.constant 0 : index
    %47 = vector.load %arg7[%c0_32, %c0_33] : memref<8x2048xf32, #tpu.memory_space<vmem>>, vector<4x2046xf32>
    %c0_34 = arith.constant 0 : index
    %c2_35 = arith.constant 2 : index
    %48 = vector.load %arg8[%c0_34, %c2_35] : memref<24x2048xf32, #tpu.memory_space<vmem>>, vector<4x2046xf32>
    tpu.vector_store %arg8[%c0_34, %c2_35], %47 {strides = array<i32>} : memref<24x2048xf32, #tpu.memory_space<vmem>>, vector<4x2046xf32>,
    %c0_36 = arith.constant 0 : index
    %c0_37 = arith.constant 0 : index
    %49 = vector.load %arg7[%c0_36, %c0_37] : memref<8x2048xf32, #tpu.memory_space<vmem>>, vector<4x2047xf32>
    %c8 = arith.constant 8 : index
    %c1_38 = arith.constant 1 : index
    %50 = vector.load %arg8[%c8, %c1_38] : memref<24x2048xf32, #tpu.memory_space<vmem>>, vector<4x2047xf32>
    tpu.vector_store %arg8[%c8, %c1_38], %49 {strides = array<i32>} : memref<24x2048xf32, #tpu.memory_space<vmem>>, vector<4x2047xf32>,
    %c0_39 = arith.constant 0 : index
    %c0_40 = arith.constant 0 : index
    %51 = vector.load %arg7[%c0_39, %c0_40] : memref<8x2048xf32, #tpu.memory_space<vmem>>, vector<4x2048xf32>
    %c16 = arith.constant 16 : index
    %c0_41 = arith.constant 0 : index
    %52 = vector.load %arg8[%c16, %c0_41] : memref<24x2048xf32, #tpu.memory_space<vmem>>, vector<4x2048xf32>
    tpu.vector_store %arg8[%c16, %c0_41], %51 {strides = array<i32>} : memref<24x2048xf32, #tpu.memory_space<vmem>>, vector<4x2048xf32>,
    %c0_42 = arith.constant 0 : index
    %c0_43 = arith.constant 0 : index
    %53 = vector.load %arg2[%c0_42, %c0_43] : memref<8x24xf32, #tpu.memory_space<vmem>>, vector<8x24xf32>
    %c0_44 = arith.constant 0 : index
    %c0_45 = arith.constant 0 : index
    %54 = vector.load %arg8[%c0_44, %c0_45] : memref<24x2048xf32, #tpu.memory_space<vmem>>, vector<24x2048xf32>
    %cst_46 = arith.constant dense<0.000000e+00> : vector<8x2048xf32>
    %55 = tpu.matmul %53, %54, %cst_46 {dimension_numbers = #tpu.dot_dimension_numbers<[1], [0], [0], [1], [0, 0, 1, 1], [], []>} : vector<8x24xf32>, vector<24x2048xf32>, vector<8x2048xf32> -> vector<8x2048xf32>
    %c0_47 = arith.constant 0 : index
    %c0_48 = arith.constant 0 : index
    %56 = vector.load %arg4[%c0_47, %c0_48] : memref<8x1xf32, #tpu.memory_space<vmem>>, vector<8x1xf32>
    %57 = vector.broadcast %56 : vector<8x1xf32> to vector<8x2048xf32>
    %58 = arith.addf %55, %57 : vector<8x2048xf32>
    %cst_49 = arith.constant 0.000000e+00 : f32
    %59 = vector.broadcast %cst_49 : f32 to vector<8x2048xf32>
    %60 = arith.maximumf %58, %59 : vector<8x2048xf32>
    %cst_50 = arith.constant 0.000000e+00 : f32
    %61 = vector.shape_cast %22 : vector<1x2048xi1> to vector<1x2048xi1>
    %62 = vector.broadcast %61 : vector<1x2048xi1> to vector<8x2048xi1>
    %63 = vector.broadcast %cst_50 : f32 to vector<8x2048xf32>
    %64 = arith.select %62, %60, %63 : vector<8x2048xi1>, vector<8x2048xf32>
    %c0_51 = arith.constant 0 : index
    %c0_52 = arith.constant 0 : index
    %65 = vector.load %arg7[%c0_51, %c0_52] : memref<8x2048xf32, #tpu.memory_space<vmem>>, vector<8x2048xf32>
    tpu.vector_store %arg7[%c0_51, %c0_52], %64 {strides = array<i32>} : memref<8x2048xf32, #tpu.memory_space<vmem>>, vector<8x2048xf32>,
    %c0_53 = arith.constant 0 : index
    %c0_54 = arith.constant 0 : index
    %66 = vector.load %arg7[%c0_53, %c0_54] : memref<8x2048xf32, #tpu.memory_space<vmem>>, vector<8x2044xf32>
    %c0_55 = arith.constant 0 : index
    %c4_56 = arith.constant 4 : index
    %67 = vector.load %arg8[%c0_55, %c4_56] : memref<24x2048xf32, #tpu.memory_space<vmem>>, vector<8x2044xf32>
    tpu.vector_store %arg8[%c0_55, %c4_56], %66 {strides = array<i32>} : memref<24x2048xf32, #tpu.memory_space<vmem>>, vector<8x2044xf32>,
    %c0_57 = arith.constant 0 : index
    %c0_58 = arith.constant 0 : index
    %68 = vector.load %arg7[%c0_57, %c0_58] : memref<8x2048xf32, #tpu.memory_space<vmem>>, vector<8x2046xf32>
    %c8_59 = arith.constant 8 : index
    %c2_60 = arith.constant 2 : index
    %69 = vector.load %arg8[%c8_59, %c2_60] : memref<24x2048xf32, #tpu.memory_space<vmem>>, vector<8x2046xf32>
    tpu.vector_store %arg8[%c8_59, %c2_60], %68 {strides = array<i32>} : memref<24x2048xf32, #tpu.memory_space<vmem>>, vector<8x2046xf32>,
    %c0_61 = arith.constant 0 : index
    %c0_62 = arith.constant 0 : index
    %70 = vector.load %arg7[%c0_61, %c0_62] : memref<8x2048xf32, #tpu.memory_space<vmem>>, vector<8x2048xf32>
    %c16_63 = arith.constant 16 : index
    %c0_64 = arith.constant 0 : index
    %71 = vector.load %arg8[%c16_63, %c0_64] : memref<24x2048xf32, #tpu.memory_space<vmem>>, vector<8x2048xf32>
    tpu.vector_store %arg8[%c16_63, %c0_64], %70 {strides = array<i32>} : memref<24x2048xf32, #tpu.memory_space<vmem>>, vector<8x2048xf32>,
    %c0_65 = arith.constant 0 : index
    %c0_66 = arith.constant 0 : index
    %72 = vector.load %arg3[%c0_65, %c0_66] : memref<8x24xf32, #tpu.memory_space<vmem>>, vector<8x24xf32>
    %c0_67 = arith.constant 0 : index
    %c0_68 = arith.constant 0 : index
    %73 = vector.load %arg8[%c0_67, %c0_68] : memref<24x2048xf32, #tpu.memory_space<vmem>>, vector<24x2048xf32>
    %cst_69 = arith.constant dense<0.000000e+00> : vector<8x2048xf32>
    %74 = tpu.matmul %72, %73, %cst_69 {dimension_numbers = #tpu.dot_dimension_numbers<[1], [0], [0], [1], [0, 0, 1, 1], [], []>} : vector<8x24xf32>, vector<24x2048xf32>, vector<8x2048xf32> -> vector<8x2048xf32>
    %c0_70 = arith.constant 0 : index
    %c0_71 = arith.constant 0 : index
    %75 = vector.load %arg5[%c0_70, %c0_71] : memref<8x1xf32, #tpu.memory_space<vmem>>, vector<8x1xf32>
    %76 = vector.broadcast %75 : vector<8x1xf32> to vector<8x2048xf32>
    %77 = arith.addf %74, %76 : vector<8x2048xf32>
    %cst_72 = arith.constant 0.000000e+00 : f32
    %78 = vector.broadcast %cst_72 : f32 to vector<8x2048xf32>
    %79 = arith.maximumf %77, %78 : vector<8x2048xf32>
    %cst_73 = arith.constant dense<0xFF800000> : vector<2048xf32>
    %80 = vector.multi_reduction <maximumf>, %79, %cst_73 [0] : vector<8x2048xf32> to vector<2048xf32>
    %81 = vector.shape_cast %80 : vector<2048xf32> to vector<1x2048xf32>
    %82 = vector.extract_strided_slice %81 {offsets = [0, 128], sizes = [1, 128], strides = [1, 1]} : vector<1x2048xf32> to vector<1x128xf32>
    %c0_74 = arith.constant 0 : index
    %c0_75 = arith.constant 0 : index
    %83 = vector.load %arg6[%c0_74, %c0_75] : memref<8x128xf32, #tpu.memory_space<vmem>>, vector<1x128xf32>
    tpu.vector_store %arg6[%c0_74, %c0_75], %82 {strides = array<i32>} : memref<8x128xf32, #tpu.memory_space<vmem>>, vector<1x128xf32>,
    %84 = vector.extract_strided_slice %81 {offsets = [0, 384], sizes = [1, 128], strides = [1, 1]} : vector<1x2048xf32> to vector<1x128xf32>
    %c1_76 = arith.constant 1 : index
    %c0_77 = arith.constant 0 : index
    %85 = vector.load %arg6[%c1_76, %c0_77] : memref<8x128xf32, #tpu.memory_space<vmem>>, vector<1x128xf32>
    tpu.vector_store %arg6[%c1_76, %c0_77], %84 {strides = array<i32>} : memref<8x128xf32, #tpu.memory_space<vmem>>, vector<1x128xf32>,
    %86 = vector.extract_strided_slice %81 {offsets = [0, 640], sizes = [1, 128], strides = [1, 1]} : vector<1x2048xf32> to vector<1x128xf32>
    %c2_78 = arith.constant 2 : index
    %c0_79 = arith.constant 0 : index
    %87 = vector.load %arg6[%c2_78, %c0_79] : memref<8x128xf32, #tpu.memory_space<vmem>>, vector<1x128xf32>
    tpu.vector_store %arg6[%c2_78, %c0_79], %86 {strides = array<i32>} : memref<8x128xf32, #tpu.memory_space<vmem>>, vector<1x128xf32>,
    %88 = vector.extract_strided_slice %81 {offsets = [0, 896], sizes = [1, 128], strides = [1, 1]} : vector<1x2048xf32> to vector<1x128xf32>
    %c3_80 = arith.constant 3 : index
    %c0_81 = arith.constant 0 : index
    %89 = vector.load %arg6[%c3_80, %c0_81] : memref<8x128xf32, #tpu.memory_space<vmem>>, vector<1x128xf32>
    tpu.vector_store %arg6[%c3_80, %c0_81], %88 {strides = array<i32>} : memref<8x128xf32, #tpu.memory_space<vmem>>, vector<1x128xf32>,
    %90 = vector.extract_strided_slice %81 {offsets = [0, 1152], sizes = [1, 128], strides = [1, 1]} : vector<1x2048xf32> to vector<1x128xf32>
    %c4_82 = arith.constant 4 : index
    %c0_83 = arith.constant 0 : index
    %91 = vector.load %arg6[%c4_82, %c0_83] : memref<8x128xf32, #tpu.memory_space<vmem>>, vector<1x128xf32>
    tpu.vector_store %arg6[%c4_82, %c0_83], %90 {strides = array<i32>} : memref<8x128xf32, #tpu.memory_space<vmem>>, vector<1x128xf32>,
    %92 = vector.extract_strided_slice %81 {offsets = [0, 1408], sizes = [1, 128], strides = [1, 1]} : vector<1x2048xf32> to vector<1x128xf32>
    %c5_84 = arith.constant 5 : index
    %c0_85 = arith.constant 0 : index
    %93 = vector.load %arg6[%c5_84, %c0_85] : memref<8x128xf32, #tpu.memory_space<vmem>>, vector<1x128xf32>
    tpu.vector_store %arg6[%c5_84, %c0_85], %92 {strides = array<i32>} : memref<8x128xf32, #tpu.memory_space<vmem>>, vector<1x128xf32>,
    %94 = vector.extract_strided_slice %81 {offsets = [0, 1664], sizes = [1, 128], strides = [1, 1]} : vector<1x2048xf32> to vector<1x128xf32>
    %c6_86 = arith.constant 6 : index
    %c0_87 = arith.constant 0 : index
    %95 = vector.load %arg6[%c6_86, %c0_87] : memref<8x128xf32, #tpu.memory_space<vmem>>, vector<1x128xf32>
    tpu.vector_store %arg6[%c6_86, %c0_87], %94 {strides = array<i32>} : memref<8x128xf32, #tpu.memory_space<vmem>>, vector<1x128xf32>,
    %96 = vector.extract_strided_slice %81 {offsets = [0, 1920], sizes = [1, 128], strides = [1, 1]} : vector<1x2048xf32> to vector<1x128xf32>
    %c7_88 = arith.constant 7 : index
    %c0_89 = arith.constant 0 : index
    %97 = vector.load %arg6[%c7_88, %c0_89] : memref<8x128xf32, #tpu.memory_space<vmem>>, vector<1x128xf32>
    tpu.vector_store %arg6[%c7_88, %c0_89], %96 {strides = array<i32>} : memref<8x128xf32, #tpu.memory_space<vmem>>, vector<1x128xf32>,
    return
  }
  func.func @transform_0(%arg0: i32) -> (i32, i32, i32) {
    %c0_i32 = arith.constant 0 : i32
    %c0_i32_0 = arith.constant 0 : i32
    %c0_i32_1 = arith.constant 0 : i32
    return %arg0, %c0_i32, %c0_i32_0 : i32, i32, i32
  }
  func.func @transform_1(%arg0: i32) -> (i32, i32) {
    %c0_i32 = arith.constant 0 : i32
    %c0_i32_0 = arith.constant 0 : i32
    %c0_i32_1 = arith.constant 0 : i32
    return %c0_i32, %c0_i32_0 : i32, i32
  }
  func.func @transform_2(%arg0: i32) -> (i32, i32) {
    %c0_i32 = arith.constant 0 : i32
    %c0_i32_0 = arith.constant 0 : i32
    %c0_i32_1 = arith.constant 0 : i32
    return %c0_i32, %c0_i32_0 : i32, i32
  }
  func.func @transform_3(%arg0: i32) -> (i32, i32) {
    %c0_i32 = arith.constant 0 : i32
    %c0_i32_0 = arith.constant 0 : i32
    %c0_i32_1 = arith.constant 0 : i32
    return %c0_i32, %c0_i32_0 : i32, i32
  }
  func.func @transform_4(%arg0: i32) -> (i32, i32) {
    %c0_i32 = arith.constant 0 : i32
    %c0_i32_0 = arith.constant 0 : i32
    %c0_i32_1 = arith.constant 0 : i32
    return %c0_i32, %c0_i32_0 : i32, i32
  }
  func.func @transform_5(%arg0: i32) -> (i32, i32) {
    %c0_i32 = arith.constant 0 : i32
    %c0_i32_0 = arith.constant 0 : i32
    return %arg0, %c0_i32 : i32, i32
  }
}

</mosaic_0001>

<llo_original>
// kernel: tpu_custom_call.1
$region0: #{tpu_custom_call.1}
  #allocation0 [shape = 'u32[]', space=smem, size = 0x4, offset = 0x4, fixed_abs, tag = 'smem constant byte address 0x4 - core index']
  #allocation1 [shape = 'u32[144,128]{1,0:T(1,128)}', space=vmem, size = 0x12000, scoped, tag = 'internal scratch']
  #allocation2 [shape = 'f32[8,2048]{1,0:T(8,128)}', space=vmem, size = 0x10000, scoped, tag = 'scratch operand']
  #allocation3 [shape = 'f32[24,2048]{1,0:T(8,128)}', space=vmem, size = 0x30000, scoped, tag = 'scratch operand']
  %s0 = inlined_call_operand.hbm [shape: f32[8,4,128], index: 0, kind: input, shape index: {}]
  %s1 = inlined_call_operand.vmem [shape: f32[8,24], index: 1, kind: input, shape index: {}]
  %s2 = inlined_call_operand.vmem [shape: f32[8,24], index: 2, kind: input, shape index: {}]
  %s3 = inlined_call_operand.vmem [shape: f32[8,1], index: 3, kind: input, shape index: {}]
  %s4 = inlined_call_operand.vmem [shape: f32[8,1], index: 4, kind: input, shape index: {}]
  %s5 = inlined_call_operand.hbm [shape: f32[8,128], index: 5, kind: output, shape index: {}]
  %s6 = sld [smem:[#allocation0]]
  $region34: #{tpu_custom_call.1} parent=0
    _
  %s8 = ssub.s32 1, %s6
  %s9 = scalar_select 0, %s8, %s6
  $region1: #{tpu_custom_call.1} parent=0
    #allocation4 [shape = 'u8[16384]{0}', space=vmem, size = 0x4000, scoped, tag = 'input window, operand 0, single buffered']
    #allocation5 [shape = 's32[1]{0}', space=sflag, size = 0x4, scoped, tag = 'scoped memory for tpu_custom_call.1']
    #allocation6 [shape = 's32[1]{0}', space=sflag, size = 0x4, scoped, tag = 'scoped memory for tpu_custom_call.1']
    #allocation7 [shape = 'u8[4096]{0}', space=vmem, size = 0x1000, scoped, tag = 'output window, operand 0, single buffered']
    %10 = vsyncpa [#allocation5], 0
    %11 = vsyncpa [#allocation6], 0
    // Predicated region
    $region2: #{tpu_custom_call.1} parent=1 // pred_check
      _
    $region3: #{tpu_custom_call.1} parent=1 // pred_check_branch
      %13 = sbr.rel (0) target = $region5
    $region4: #{tpu_custom_call.1} parent=1 // pred_region
      %s15 = ssub.s32 512, 512
      %16 = vsyncadd [#allocation5], %s15
      %s17 = sshll.u32 [#allocation4], 4
      %s18 = int_to_ptr.vmem [resolvable:$true] %s17
      %23 = dma.hbm_to_vmem [thread:$0]  %s0, 512, %s18, [#allocation5], 64, 64, 4
    $region5: #{tpu_custom_call.1} parent=1 // pred_fallthru
      _
    // Predicated region
    $region6: #{tpu_custom_call.1} parent=1 // pred_check
      _
    $region7: #{tpu_custom_call.1} parent=1 // pred_check_branch
      %25 = sbr.rel (0) target = $region9
    $region8: #{tpu_custom_call.1} parent=1 // pred_region
      _
    $region9: #{tpu_custom_call.1} parent=1 // pred_fallthru
      _
    // Predicated region
    $region10: #{tpu_custom_call.1} parent=1 // pred_check
      _
    $region11: #{tpu_custom_call.1} parent=1 // pred_check_branch
      %27 = sbr.rel (0) target = $region13
    $region12: #{tpu_custom_call.1} parent=1 // pred_region
      _
    $region13: #{tpu_custom_call.1} parent=1 // pred_fallthru
      _
    // Predicated region
    $region14: #{tpu_custom_call.1} parent=1 // pred_check
      _
    $region15: #{tpu_custom_call.1} parent=1 // pred_check_branch
      %29 = sbr.rel (0) target = $region17
    $region16: #{tpu_custom_call.1} parent=1 // pred_region
      _
    $region17: #{tpu_custom_call.1} parent=1 // pred_fallthru
      _
    // Predicated region
    $region18: #{tpu_custom_call.1} parent=1 // pred_check
      _
    $region19: #{tpu_custom_call.1} parent=1 // pred_check_branch
      %31 = sbr.rel (0) target = $region21
    $region20: #{tpu_custom_call.1} parent=1 // pred_region
      _
    $region21: #{tpu_custom_call.1} parent=1 // pred_fallthru
      _
    // Predicated region
    $region22: #{tpu_custom_call.1} parent=1 // pred_check
      _
    $region23: #{tpu_custom_call.1} parent=1 // pred_check_branch
      %33 = sbr.rel (0) target = $region25
    $region24: #{tpu_custom_call.1} parent=1 // pred_region
      %34 = dma.done [#allocation5], 512
    $region25: #{tpu_custom_call.1} parent=1 // pred_fallthru
      _
    %35 = vst [vmem:[#allocation2] sm:$0xff] 0.0
    %36 = vst [vmem:[#allocation2 + $0x8] sm:$0xff] 0.0
    %37 = vst [vmem:[#allocation2 + $0x10] sm:$0xff] 0.0
    %38 = vst [vmem:[#allocation2 + $0x18] sm:$0xff] 0.0
    %39 = vst [vmem:[#allocation2 + $0x20] sm:$0xff] 0.0
    %40 = vst [vmem:[#allocation2 + $0x28] sm:$0xff] 0.0
    %41 = vst [vmem:[#allocation2 + $0x30] sm:$0xff] 0.0
    %42 = vst [vmem:[#allocation2 + $0x38] sm:$0xff] 0.0
    %43 = vst [vmem:[#allocation2 + $0x40] sm:$0xff] 0.0
    %44 = vst [vmem:[#allocation2 + $0x48] sm:$0xff] 0.0
    %45 = vst [vmem:[#allocation2 + $0x50] sm:$0xff] 0.0
    %46 = vst [vmem:[#allocation2 + $0x58] sm:$0xff] 0.0
    %47 = vst [vmem:[#allocation2 + $0x60] sm:$0xff] 0.0
    %48 = vst [vmem:[#allocation2 + $0x68] sm:$0xff] 0.0
    %49 = vst [vmem:[#allocation2 + $0x70] sm:$0xff] 0.0
    %50 = vst [vmem:[#allocation2 + $0x78] sm:$0xff] 0.0
    %51 = vst [vmem:[#allocation3] sm:$0xff] 0.0
    %52 = vst [vmem:[#allocation3 + $0x8] sm:$0xff] 0.0
    %53 = vst [vmem:[#allocation3 + $0x10] sm:$0xff] 0.0
    %54 = vst [vmem:[#allocation3 + $0x18] sm:$0xff] 0.0
    %55 = vst [vmem:[#allocation3 + $0x20] sm:$0xff] 0.0
    %56 = vst [vmem:[#allocation3 + $0x28] sm:$0xff] 0.0
    %57 = vst [vmem:[#allocation3 + $0x30] sm:$0xff] 0.0
    %58 = vst [vmem:[#allocation3 + $0x38] sm:$0xff] 0.0
    %59 = vst [vmem:[#allocation3 + $0x40] sm:$0xff] 0.0
    %60 = vst [vmem:[#allocation3 + $0x48] sm:$0xff] 0.0
    %61 = vst [vmem:[#allocation3 + $0x50] sm:$0xff] 0.0
    %62 = vst [vmem:[#allocation3 + $0x58] sm:$0xff] 0.0
    %63 = vst [vmem:[#allocation3 + $0x60] sm:$0xff] 0.0
    %64 = vst [vmem:[#allocation3 + $0x68] sm:$0xff] 0.0
    %65 = vst [vmem:[#allocation3 + $0x70] sm:$0xff] 0.0
    %66 = vst [vmem:[#allocation3 + $0x78] sm:$0xff] 0.0
    %67 = vst [vmem:[#allocation3 + $0x80] sm:$0xff] 0.0
    %68 = vst [vmem:[#allocation3 + $0x88] sm:$0xff] 0.0
    %69 = vst [vmem:[#allocation3 + $0x90] sm:$0xff] 0.0
    %70 = vst [vmem:[#allocation3 + $0x98] sm:$0xff] 0.0
    %71 = vst [vmem:[#allocation3 + $0xa0] sm:$0xff] 0.0
    %72 = vst [vmem:[#allocation3 + $0xa8] sm:$0xff] 0.0
    %73 = vst [vmem:[#allocation3 + $0xb0] sm:$0xff] 0.0
    %74 = vst [vmem:[#allocation3 + $0xb8] sm:$0xff] 0.0
    %75 = vst [vmem:[#allocation3 + $0xc0] sm:$0xff] 0.0
    %76 = vst [vmem:[#allocation3 + $0xc8] sm:$0xff] 0.0
    %77 = vst [vmem:[#allocation3 + $0xd0] sm:$0xff] 0.0
    %78 = vst [vmem:[#allocation3 + $0xd8] sm:$0xff] 0.0
    %79 = vst [vmem:[#allocation3 + $0xe0] sm:$0xff] 0.0
    %80 = vst [vmem:[#allocation3 + $0xe8] sm:$0xff] 0.0
    %81 = vst [vmem:[#allocation3 + $0xf0] sm:$0xff] 0.0
    %82 = vst [vmem:[#allocation3 + $0xf8] sm:$0xff] 0.0
    %83 = vst [vmem:[#allocation3 + $0x100] sm:$0xff] 0.0
    %84 = vst [vmem:[#allocation3 + $0x108] sm:$0xff] 0.0
    %85 = vst [vmem:[#allocation3 + $0x110] sm:$0xff] 0.0
    %86 = vst [vmem:[#allocation3 + $0x118] sm:$0xff] 0.0
    %87 = vst [vmem:[#allocation3 + $0x120] sm:$0xff] 0.0
    %88 = vst [vmem:[#allocation3 + $0x128] sm:$0xff] 0.0
    %89 = vst [vmem:[#allocation3 + $0x130] sm:$0xff] 0.0
    %90 = vst [vmem:[#allocation3 + $0x138] sm:$0xff] 0.0
    %91 = vst [vmem:[#allocation3 + $0x140] sm:$0xff] 0.0
    %92 = vst [vmem:[#allocation3 + $0x148] sm:$0xff] 0.0
    %93 = vst [vmem:[#allocation3 + $0x150] sm:$0xff] 0.0
    %94 = vst [vmem:[#allocation3 + $0x158] sm:$0xff] 0.0
    %95 = vst [vmem:[#allocation3 + $0x160] sm:$0xff] 0.0
    %96 = vst [vmem:[#allocation3 + $0x168] sm:$0xff] 0.0
    %97 = vst [vmem:[#allocation3 + $0x170] sm:$0xff] 0.0
    %98 = vst [vmem:[#allocation3 + $0x178] sm:$0xff] 0.0
    %v99 = vlaneseq
    %v100 = vand.u32 %v99, 127
    %v101 = vadd.s32 %v100, 128
    %v102 = vadd.s32 %v100, 256
    %v103 = vadd.s32 %v100, 384
    %v104 = vadd.s32 %v100, 512
    %v105 = vadd.s32 %v100, 640
    %v106 = vadd.s32 %v100, 768
    %v107 = vadd.s32 %v100, 896
    %v108 = vadd.s32 %v100, 1024
    %v109 = vadd.s32 %v100, 1152
    %v110 = vadd.s32 %v100, 1280
    %v111 = vadd.s32 %v100, 1408
    %v112 = vadd.s32 %v100, 1536
    %v113 = vadd.s32 %v100, 1664
    %v114 = vadd.s32 %v100, 1792
    %v115 = vadd.s32 %v100, 1920
    %vm116 = vcmp.lt.s32.totalorder %v100, 0
    %v117 = vsub.s32 0, %v100
    %v118 = vsel %vm116, %v117, %v100
    %v119 = vshrl.u32 %v118, 8
    %v120 = vand.u32 %v118, 255
    %v121 = vsub.s32 0, %v120
    %v122 = vsel %vm116, %v121, %v120
    %vm123 = vcmp.lt.s32.totalorder %v101, 0
    %v124 = vsub.s32 0, %v101
    %v125 = vsel %vm123, %v124, %v101
    %v126 = vshrl.u32 %v125, 8
    %v127 = vand.u32 %v125, 255
    %v128 = vsub.s32 0, %v127
    %v129 = vsel %vm123, %v128, %v127
    %vm130 = vcmp.lt.s32.totalorder %v102, 0
    %v131 = vsub.s32 0, %v102
    %v132 = vsel %vm130, %v131, %v102
    %v133 = vshrl.u32 %v132, 8
    %v134 = vand.u32 %v132, 255
    %v135 = vsub.s32 0, %v134
    %v136 = vsel %vm130, %v135, %v134
    %vm137 = vcmp.lt.s32.totalorder %v103, 0
    %v138 = vsub.s32 0, %v103
    %v139 = vsel %vm137, %v138, %v103
    %v140 = vshrl.u32 %v139, 8
    %v141 = vand.u32 %v139, 255
    %v142 = vsub.s32 0, %v141
    %v143 = vsel %vm137, %v142, %v141
    %vm144 = vcmp.lt.s32.totalorder %v104, 0
    %v145 = vsub.s32 0, %v104
    %v146 = vsel %vm144, %v145, %v104
    %v147 = vshrl.u32 %v146, 8
    %v148 = vand.u32 %v146, 255
    %v149 = vsub.s32 0, %v148
    %v150 = vsel %vm144, %v149, %v148
    %vm151 = vcmp.lt.s32.totalorder %v105, 0
    %v152 = vsub.s32 0, %v105
    %v153 = vsel %vm151, %v152, %v105
    %v154 = vshrl.u32 %v153, 8
    %v155 = vand.u32 %v153, 255
    %v156 = vsub.s32 0, %v155
    %v157 = vsel %vm151, %v156, %v155
    %vm158 = vcmp.lt.s32.totalorder %v106, 0
    %v159 = vsub.s32 0, %v106
    %v160 = vsel %vm158, %v159, %v106
    %v161 = vshrl.u32 %v160, 8
    %v162 = vand.u32 %v160, 255
    %v163 = vsub.s32 0, %v162
    %v164 = vsel %vm158, %v163, %v162
    %vm165 = vcmp.lt.s32.totalorder %v107, 0
    %v166 = vsub.s32 0, %v107
    %v167 = vsel %vm165, %v166, %v107
    %v168 = vshrl.u32 %v167, 8
    %v169 = vand.u32 %v167, 255
    %v170 = vsub.s32 0, %v169
    %v171 = vsel %vm165, %v170, %v169
    %vm172 = vcmp.lt.s32.totalorder %v108, 0
    %v173 = vsub.s32 0, %v108
    %v174 = vsel %vm172, %v173, %v108
    %v175 = vshrl.u32 %v174, 8
    %v176 = vand.u32 %v174, 255
    %v177 = vsub.s32 0, %v176
    %v178 = vsel %vm172, %v177, %v176
    %vm179 = vcmp.lt.s32.totalorder %v109, 0
    %v180 = vsub.s32 0, %v109
    %v181 = vsel %vm179, %v180, %v109
    %v182 = vshrl.u32 %v181, 8
    %v183 = vand.u32 %v181, 255
    %v184 = vsub.s32 0, %v183
    %v185 = vsel %vm179, %v184, %v183
    %vm186 = vcmp.lt.s32.totalorder %v110, 0
    %v187 = vsub.s32 0, %v110
    %v188 = vsel %vm186, %v187, %v110
    %v189 = vshrl.u32 %v188, 8
    %v190 = vand.u32 %v188, 255
    %v191 = vsub.s32 0, %v190
    %v192 = vsel %vm186, %v191, %v190
    %vm193 = vcmp.lt.s32.totalorder %v111, 0
    %v194 = vsub.s32 0, %v111
    %v195 = vsel %vm193, %v194, %v111
    %v196 = vshrl.u32 %v195, 8
    %v197 = vand.u32 %v195, 255
    %v198 = vsub.s32 0, %v197
    %v199 = vsel %vm193, %v198, %v197
    %vm200 = vcmp.lt.s32.totalorder %v112, 0
    %v201 = vsub.s32 0, %v112
    %v202 = vsel %vm200, %v201, %v112
    %v203 = vshrl.u32 %v202, 8
    %v204 = vand.u32 %v202, 255
    %v205 = vsub.s32 0, %v204
    %v206 = vsel %vm200, %v205, %v204
    %vm207 = vcmp.lt.s32.totalorder %v113, 0
    %v208 = vsub.s32 0, %v113
    %v209 = vsel %vm207, %v208, %v113
    %v210 = vshrl.u32 %v209, 8
    %v211 = vand.u32 %v209, 255
    %v212 = vsub.s32 0, %v211
    %v213 = vsel %vm207, %v212, %v211
    %vm214 = vcmp.lt.s32.totalorder %v114, 0
    %v215 = vsub.s32 0, %v114
    %v216 = vsel %vm214, %v215, %v114
    %v217 = vshrl.u32 %v216, 8
    %v218 = vand.u32 %v216, 255
    %v219 = vsub.s32 0, %v218
    %v220 = vsel %vm214, %v219, %v218
    %vm221 = vcmp.lt.s32.totalorder %v115, 0
    %v222 = vsub.s32 0, %v115
    %v223 = vsel %vm221, %v222, %v115
    %v224 = vshrl.u32 %v223, 8
    %v225 = vand.u32 %v223, 255
    %v226 = vsub.s32 0, %v225
    %v227 = vsel %vm221, %v226, %v225
    %vm228 = vcmp.ne.s32.totalorder %v122, 0
    %vm229 = vcmp.ne.s32.totalorder %v129, 0
    %vm230 = vcmp.ne.s32.totalorder %v136, 0
    %vm231 = vcmp.ne.s32.totalorder %v143, 0
    %vm232 = vcmp.ne.s32.totalorder %v150, 0
    %vm233 = vcmp.ne.s32.totalorder %v157, 0
    %vm234 = vcmp.ne.s32.totalorder %v164, 0
    %vm235 = vcmp.ne.s32.totalorder %v171, 0
    %vm236 = vcmp.ne.s32.totalorder %v178, 0
    %vm237 = vcmp.ne.s32.totalorder %v185, 0
    %vm238 = vcmp.ne.s32.totalorder %v192, 0
    %vm239 = vcmp.ne.s32.totalorder %v199, 0
    %vm240 = vcmp.ne.s32.totalorder %v206, 0
    %vm241 = vcmp.ne.s32.totalorder %v213, 0
    %vm242 = vcmp.ne.s32.totalorder %v220, 0
    %vm243 = vcmp.ne.s32.totalorder %v227, 0
    %vm244 = vcmp.lt.s32.totalorder %v122, 0
    %vm245 = vcmp.lt.s32.totalorder %v129, 0
    %vm246 = vcmp.lt.s32.totalorder %v136, 0
    %vm247 = vcmp.lt.s32.totalorder %v143, 0
    %vm248 = vcmp.lt.s32.totalorder %v150, 0
    %vm249 = vcmp.lt.s32.totalorder %v157, 0
    %vm250 = vcmp.lt.s32.totalorder %v164, 0
    %vm251 = vcmp.lt.s32.totalorder %v171, 0
    %vm252 = vcmp.lt.s32.totalorder %v178, 0
    %vm253 = vcmp.lt.s32.totalorder %v185, 0
    %vm254 = vcmp.lt.s32.totalorder %v192, 0
    %vm255 = vcmp.lt.s32.totalorder %v199, 0
    %vm256 = vcmp.lt.s32.totalorder %v206, 0
    %vm257 = vcmp.lt.s32.totalorder %v213, 0
    %vm258 = vcmp.lt.s32.totalorder %v220, 0
    %vm259 = vcmp.lt.s32.totalorder %v227, 0
    %vm260 = vmand %vm244, %vm228
    %vm261 = vmand %vm245, %vm229
    %vm262 = vmand %vm246, %vm230
    %vm263 = vmand %vm247, %vm231
    %vm264 = vmand %vm248, %vm232
    %vm265 = vmand %vm249, %vm233
    %vm266 = vmand %vm250, %vm234
    %vm267 = vmand %vm251, %vm235
    %vm268 = vmand %vm252, %vm236
    %vm269 = vmand %vm253, %vm237
    %vm270 = vmand %vm254, %vm238
    %vm271 = vmand %vm255, %vm239
    %vm272 = vmand %vm256, %vm240
    %vm273 = vmand %vm257, %vm241
    %vm274 = vmand %vm258, %vm242
    %vm275 = vmand %vm259, %vm243
    %v276 = vadd.s32 %v122, 256
    %v277 = vadd.s32 %v129, 256
    %v278 = vadd.s32 %v136, 256
    %v279 = vadd.s32 %v143, 256
    %v280 = vadd.s32 %v150, 256
    %v281 = vadd.s32 %v157, 256
    %v282 = vadd.s32 %v164, 256
    %v283 = vadd.s32 %v171, 256
    %v284 = vadd.s32 %v178, 256
    %v285 = vadd.s32 %v185, 256
    %v286 = vadd.s32 %v192, 256
    %v287 = vadd.s32 %v199, 256
    %v288 = vadd.s32 %v206, 256
    %v289 = vadd.s32 %v213, 256
    %v290 = vadd.s32 %v220, 256
    %v291 = vadd.s32 %v227, 256
    %v292 = vsel %vm260, %v276, %v122
    %v293 = vsel %vm261, %v277, %v129
    %v294 = vsel %vm262, %v278, %v136
    %v295 = vsel %vm263, %v279, %v143
    %v296 = vsel %vm264, %v280, %v150
    %v297 = vsel %vm265, %v281, %v157
    %v298 = vsel %vm266, %v282, %v164
    %v299 = vsel %vm267, %v283, %v171
    %v300 = vsel %vm268, %v284, %v178
    %v301 = vsel %vm269, %v285, %v185
    %v302 = vsel %vm270, %v286, %v192
    %v303 = vsel %vm271, %v287, %v199
    %v304 = vsel %vm272, %v288, %v206
    %v305 = vsel %vm273, %v289, %v213
    %v306 = vsel %vm274, %v290, %v220
    %v307 = vsel %vm275, %v291, %v227
    %vm308 = vcmp.ge.s32.totalorder %v292, 128
    %vm309 = vcmp.ge.s32.totalorder %v293, 128
    %vm310 = vcmp.ge.s32.totalorder %v294, 128
    %vm311 = vcmp.ge.s32.totalorder %v295, 128
    %vm312 = vcmp.ge.s32.totalorder %v296, 128
    %vm313 = vcmp.ge.s32.totalorder %v297, 128
    %vm314 = vcmp.ge.s32.totalorder %v298, 128
    %vm315 = vcmp.ge.s32.totalorder %v299, 128
    %vm316 = vcmp.ge.s32.totalorder %v300, 128
    %vm317 = vcmp.ge.s32.totalorder %v301, 128
    %vm318 = vcmp.ge.s32.totalorder %v302, 128
    %vm319 = vcmp.ge.s32.totalorder %v303, 128
    %vm320 = vcmp.ge.s32.totalorder %v304, 128
    %vm321 = vcmp.ge.s32.totalorder %v305, 128
    %vm322 = vcmp.ge.s32.totalorder %v306, 128
    %vm323 = vcmp.ge.s32.totalorder %v307, 128
    %v324 = vld [vmem:[#allocation4] sm:$0xf]
    %325 = vst [vmem:[#allocation2 + $0x8] sm:$0xf] %v324
    %s326 = scalar_lea.vmem [#allocation4], 4
    %v327 = vld [vmem:[%s326] sm:$0xf]
    %328 = vst [vmem:[#allocation2 + $0x18] sm:$0xf] %v327
    %s329 = scalar_lea.vmem [#allocation4], 8
    %v330 = vld [vmem:[%s329] sm:$0xf]
    %331 = vst [vmem:[#allocation2 + $0x28] sm:$0xf] %v330
    %s332 = scalar_lea.vmem [#allocation4], 12
    %v333 = vld [vmem:[%s332] sm:$0xf]
    %334 = vst [vmem:[#allocation2 + $0x38] sm:$0xf] %v333
    %s335 = scalar_lea.vmem [#allocation4], 16
    %v336 = vld [vmem:[%s335] sm:$0xf]
    %337 = vst [vmem:[#allocation2 + $0x48] sm:$0xf] %v336
    %s338 = scalar_lea.vmem [#allocation4], 20
    %v339 = vld [vmem:[%s338] sm:$0xf]
    %340 = vst [vmem:[#allocation2 + $0x58] sm:$0xf] %v339
    %s341 = scalar_lea.vmem [#allocation4], 24
    %v342 = vld [vmem:[%s341] sm:$0xf]
    %343 = vst [vmem:[#allocation2 + $0x68] sm:$0xf] %v342
    %s344 = scalar_lea.vmem [#allocation4], 28
    %v345 = vld [vmem:[%s344] sm:$0xf]
    %346 = vst [vmem:[#allocation2 + $0x78] sm:$0xf] %v345
    %v347 = vld [vmem:[#allocation2] sm:$0xf]
    %v348 = vld [vmem:[#allocation2 + $0x8] sm:$0xf]
    %v349 = vld [vmem:[#allocation2 + $0x10] sm:$0xf]
    %v350 = vld [vmem:[#allocation2 + $0x18] sm:$0xf]
    %v351 = vld [vmem:[#allocation2 + $0x20] sm:$0xf]
    %v352 = vld [vmem:[#allocation2 + $0x28] sm:$0xf]
    %v353 = vld [vmem:[#allocation2 + $0x30] sm:$0xf]
    %v354 = vld [vmem:[#allocation2 + $0x38] sm:$0xf]
    %v355 = vld [vmem:[#allocation2 + $0x40] sm:$0xf]
    %v356 = vld [vmem:[#allocation2 + $0x48] sm:$0xf]
    %v357 = vld [vmem:[#allocation2 + $0x50] sm:$0xf]
    %v358 = vld [vmem:[#allocation2 + $0x58] sm:$0xf]
    %v359 = vld [vmem:[#allocation2 + $0x60] sm:$0xf]
    %v360 = vld [vmem:[#allocation2 + $0x68] sm:$0xf]
    %v361 = vld [vmem:[#allocation2 + $0x70] sm:$0xf]
    %v362 = vld [vmem:[#allocation2 + $0x78] sm:$0xf]
    %379 = vrot.lane.b32.xlu0 %v347, 2
    %v380 = vpop.permute.xlu0 %379
    %381 = vrot.lane.b32.xlu0 %v348, 2
    %v382 = vpop.permute.xlu0 %381
    %383 = vrot.lane.b32.xlu0 %v349, 2
    %v384 = vpop.permute.xlu0 %383
    %385 = vrot.lane.b32.xlu0 %v350, 2
    %v386 = vpop.permute.xlu0 %385
    %387 = vrot.lane.b32.xlu0 %v351, 2
    %v388 = vpop.permute.xlu0 %387
    %389 = vrot.lane.b32.xlu0 %v352, 2
    %v390 = vpop.permute.xlu0 %389
    %391 = vrot.lane.b32.xlu0 %v353, 2
    %v392 = vpop.permute.xlu0 %391
    %393 = vrot.lane.b32.xlu0 %v354, 2
    %v394 = vpop.permute.xlu0 %393
    %395 = vrot.lane.b32.xlu0 %v355, 2
    %v396 = vpop.permute.xlu0 %395
    %397 = vrot.lane.b32.xlu0 %v356, 2
    %v398 = vpop.permute.xlu0 %397
    %399 = vrot.lane.b32.xlu0 %v357, 2
    %v400 = vpop.permute.xlu0 %399
    %401 = vrot.lane.b32.xlu0 %v358, 2
    %v402 = vpop.permute.xlu0 %401
    %403 = vrot.lane.b32.xlu0 %v359, 2
    %v404 = vpop.permute.xlu0 %403
    %405 = vrot.lane.b32.xlu0 %v360, 2
    %v406 = vpop.permute.xlu0 %405
    %407 = vrot.lane.b32.xlu0 %v361, 2
    %v408 = vpop.permute.xlu0 %407
    %409 = vrot.lane.b32.xlu0 %v362, 2
    %v410 = vpop.permute.xlu0 %409
    %vm411 = vcmask 15360
    %v412 = vsel %vm411, %v380, %v382
    %v413 = vsel %vm411, %v382, %v384
    %v414 = vsel %vm411, %v384, %v386
    %v415 = vsel %vm411, %v386, %v388
    %v416 = vsel %vm411, %v388, %v390
    %v417 = vsel %vm411, %v390, %v392
    %v418 = vsel %vm411, %v392, %v394
    %v419 = vsel %vm411, %v394, %v396
    %v420 = vsel %vm411, %v396, %v398
    %v421 = vsel %vm411, %v398, %v400
    %v422 = vsel %vm411, %v400, %v402
    %v423 = vsel %vm411, %v402, %v404
    %v424 = vsel %vm411, %v404, %v406
    %v425 = vsel %vm411, %v406, %v408
    %v426 = vsel %vm411, %v408, %v410
    %vm443 = vcmask 1043472
    %444 = vst.msk [vmem:[#allocation3] sm:$0xf] %vm443, %v380
    %445 = vst [vmem:[#allocation3 + $0x8] sm:$0xf] %v412
    %446 = vst [vmem:[#allocation3 + $0x10] sm:$0xf] %v413
    %447 = vst [vmem:[#allocation3 + $0x18] sm:$0xf] %v414
    %448 = vst [vmem:[#allocation3 + $0x20] sm:$0xf] %v415
    %449 = vst [vmem:[#allocation3 + $0x28] sm:$0xf] %v416
    %450 = vst [vmem:[#allocation3 + $0x30] sm:$0xf] %v417
    %451 = vst [vmem:[#allocation3 + $0x38] sm:$0xf] %v418
    %452 = vst [vmem:[#allocation3 + $0x40] sm:$0xf] %v419
    %453 = vst [vmem:[#allocation3 + $0x48] sm:$0xf] %v420
    %454 = vst [vmem:[#allocation3 + $0x50] sm:$0xf] %v421
    %455 = vst [vmem:[#allocation3 + $0x58] sm:$0xf] %v422
    %456 = vst [vmem:[#allocation3 + $0x60] sm:$0xf] %v423
    %457 = vst [vmem:[#allocation3 + $0x68] sm:$0xf] %v424
    %458 = vst [vmem:[#allocation3 + $0x70] sm:$0xf] %v425
    %459 = vst [vmem:[#allocation3 + $0x78] sm:$0xf] %v426
    %v460 = vld [vmem:[#allocation2] sm:$0xf]
    %v461 = vld [vmem:[#allocation2 + $0x8] sm:$0xf]
    %v462 = vld [vmem:[#allocation2 + $0x10] sm:$0xf]
    %v463 = vld [vmem:[#allocation2 + $0x18] sm:$0xf]
    %v464 = vld [vmem:[#allocation2 + $0x20] sm:$0xf]
    %v465 = vld [vmem:[#allocation2 + $0x28] sm:$0xf]
    %v466 = vld [vmem:[#allocation2 + $0x30] sm:$0xf]
    %v467 = vld [vmem:[#allocation2 + $0x38] sm:$0xf]
    %v468 = vld [vmem:[#allocation2 + $0x40] sm:$0xf]
    %v469 = vld [vmem:[#allocation2 + $0x48] sm:$0xf]
    %v470 = vld [vmem:[#allocation2 + $0x50] sm:$0xf]
    %v471 = vld [vmem:[#allocation2 + $0x58] sm:$0xf]
    %v472 = vld [vmem:[#allocation2 + $0x60] sm:$0xf]
    %v473 = vld [vmem:[#allocation2 + $0x68] sm:$0xf]
    %v474 = vld [vmem:[#allocation2 + $0x70] sm:$0xf]
    %v475 = vld [vmem:[#allocation2 + $0x78] sm:$0xf]
    %492 = vrot.lane.b32.xlu0 %v460, 1
    %v493 = vpop.permute.xlu0 %492
    %494 = vrot.lane.b32.xlu0 %v461, 1
    %v495 = vpop.permute.xlu0 %494
    %496 = vrot.lane.b32.xlu0 %v462, 1
    %v497 = vpop.permute.xlu0 %496
    %498 = vrot.lane.b32.xlu0 %v463, 1
    %v499 = vpop.permute.xlu0 %498
    %500 = vrot.lane.b32.xlu0 %v464, 1
    %v501 = vpop.permute.xlu0 %500
    %502 = vrot.lane.b32.xlu0 %v465, 1
    %v503 = vpop.permute.xlu0 %502
    %504 = vrot.lane.b32.xlu0 %v466, 1
    %v505 = vpop.permute.xlu0 %504
    %506 = vrot.lane.b32.xlu0 %v467, 1
    %v507 = vpop.permute.xlu0 %506
    %508 = vrot.lane.b32.xlu0 %v468, 1
    %v509 = vpop.permute.xlu0 %508
    %510 = vrot.lane.b32.xlu0 %v469, 1
    %v511 = vpop.permute.xlu0 %510
    %512 = vrot.lane.b32.xlu0 %v470, 1
    %v513 = vpop.permute.xlu0 %512
    %514 = vrot.lane.b32.xlu0 %v471, 1
    %v515 = vpop.permute.xlu0 %514
    %516 = vrot.lane.b32.xlu0 %v472, 1
    %v517 = vpop.permute.xlu0 %516
    %518 = vrot.lane.b32.xlu0 %v473, 1
    %v519 = vpop.permute.xlu0 %518
    %520 = vrot.lane.b32.xlu0 %v474, 1
    %v521 = vpop.permute.xlu0 %520
    %522 = vrot.lane.b32.xlu0 %v475, 1
    %v523 = vpop.permute.xlu0 %522
    %vm524 = vcmask 7168
    %v525 = vsel %vm524, %v493, %v495
    %v526 = vsel %vm524, %v495, %v497
    %v527 = vsel %vm524, %v497, %v499
    %v528 = vsel %vm524, %v499, %v501
    %v529 = vsel %vm524, %v501, %v503
    %v530 = vsel %vm524, %v503, %v505
    %v531 = vsel %vm524, %v505, %v507
    %v532 = vsel %vm524, %v507, %v509
    %v533 = vsel %vm524, %v509, %v511
    %v534 = vsel %vm524, %v511, %v513
    %v535 = vsel %vm524, %v513, %v515
    %v536 = vsel %vm524, %v515, %v517
    %v537 = vsel %vm524, %v517, %v519
    %v538 = vsel %vm524, %v519, %v521
    %v539 = vsel %vm524, %v521, %v523
    %vm556 = vcmask 1043464
    %557 = vst.msk [vmem:[#allocation3 + $0x80] sm:$0xf] %vm556, %v493
    %558 = vst [vmem:[#allocation3 + $0x88] sm:$0xf] %v525
    %559 = vst [vmem:[#allocation3 + $0x90] sm:$0xf] %v526
    %560 = vst [vmem:[#allocation3 + $0x98] sm:$0xf] %v527
    %561 = vst [vmem:[#allocation3 + $0xa0] sm:$0xf] %v528
    %562 = vst [vmem:[#allocation3 + $0xa8] sm:$0xf] %v529
    %563 = vst [vmem:[#allocation3 + $0xb0] sm:$0xf] %v530
    %564 = vst [vmem:[#allocation3 + $0xb8] sm:$0xf] %v531
    %565 = vst [vmem:[#allocation3 + $0xc0] sm:$0xf] %v532
    %566 = vst [vmem:[#allocation3 + $0xc8] sm:$0xf] %v533
    %567 = vst [vmem:[#allocation3 + $0xd0] sm:$0xf] %v534
    %568 = vst [vmem:[#allocation3 + $0xd8] sm:$0xf] %v535
    %569 = vst [vmem:[#allocation3 + $0xe0] sm:$0xf] %v536
    %570 = vst [vmem:[#allocation3 + $0xe8] sm:$0xf] %v537
    %571 = vst [vmem:[#allocation3 + $0xf0] sm:$0xf] %v538
    %572 = vst [vmem:[#allocation3 + $0xf8] sm:$0xf] %v539
    %v573 = vld [vmem:[#allocation2] sm:$0xf]
    %v574 = vld [vmem:[#allocation2 + $0x8] sm:$0xf]
    %v575 = vld [vmem:[#allocation2 + $0x10] sm:$0xf]
    %v576 = vld [vmem:[#allocation2 + $0x18] sm:$0xf]
    %v577 = vld [vmem:[#allocation2 + $0x20] sm:$0xf]
    %v578 = vld [vmem:[#allocation2 + $0x28] sm:$0xf]
    %v579 = vld [vmem:[#allocation2 + $0x30] sm:$0xf]
    %v580 = vld [vmem:[#allocation2 + $0x38] sm:$0xf]
    %v581 = vld [vmem:[#allocation2 + $0x40] sm:$0xf]
    %v582 = vld [vmem:[#allocation2 + $0x48] sm:$0xf]
    %v583 = vld [vmem:[#allocation2 + $0x50] sm:$0xf]
    %v584 = vld [vmem:[#allocation2 + $0x58] sm:$0xf]
    %v585 = vld [vmem:[#allocation2 + $0x60] sm:$0xf]
    %v586 = vld [vmem:[#allocation2 + $0x68] sm:$0xf]
    %v587 = vld [vmem:[#allocation2 + $0x70] sm:$0xf]
    %v588 = vld [vmem:[#allocation2 + $0x78] sm:$0xf]
    %589 = vst [vmem:[#allocation3 + $0x100] sm:$0xf] %v573
    %590 = vst [vmem:[#allocation3 + $0x108] sm:$0xf] %v574
    %591 = vst [vmem:[#allocation3 + $0x110] sm:$0xf] %v575
    %592 = vst [vmem:[#allocation3 + $0x118] sm:$0xf] %v576
    %593 = vst [vmem:[#allocation3 + $0x120] sm:$0xf] %v577
    %594 = vst [vmem:[#allocation3 + $0x128] sm:$0xf] %v578
    %595 = vst [vmem:[#allocation3 + $0x130] sm:$0xf] %v579
    %596 = vst [vmem:[#allocation3 + $0x138] sm:$0xf] %v580
    %597 = vst [vmem:[#allocation3 + $0x140] sm:$0xf] %v581
    %598 = vst [vmem:[#allocation3 + $0x148] sm:$0xf] %v582
    %599 = vst [vmem:[#allocation3 + $0x150] sm:$0xf] %v583
    %600 = vst [vmem:[#allocation3 + $0x158] sm:$0xf] %v584
    %601 = vst [vmem:[#allocation3 + $0x160] sm:$0xf] %v585
    %602 = vst [vmem:[#allocation3 + $0x168] sm:$0xf] %v586
    %603 = vst [vmem:[#allocation3 + $0x170] sm:$0xf] %v587
    %604 = vst [vmem:[#allocation3 + $0x178] sm:$0xf] %v588
    %v605 = vld [vmem:[%s1] sm:$0xff]
    %v606 = vld [vmem:[#allocation3] sm:$0xff]
    %v607 = vld [vmem:[#allocation3 + $0x8] sm:$0xff]
    %v608 = vld [vmem:[#allocation3 + $0x10] sm:$0xff]
    %v609 = vld [vmem:[#allocation3 + $0x18] sm:$0xff]
    %v610 = vld [vmem:[#allocation3 + $0x20] sm:$0xff]
    %v611 = vld [vmem:[#allocation3 + $0x28] sm:$0xff]
    %v612 = vld [vmem:[#allocation3 + $0x30] sm:$0xff]
    %v613 = vld [vmem:[#allocation3 + $0x38] sm:$0xff]
    %v614 = vld [vmem:[#allocation3 + $0x40] sm:$0xff]
    %v615 = vld [vmem:[#allocation3 + $0x48] sm:$0xff]
    %v616 = vld [vmem:[#allocation3 + $0x50] sm:$0xff]
    %v617 = vld [vmem:[#allocation3 + $0x58] sm:$0xff]
    %v618 = vld [vmem:[#allocation3 + $0x60] sm:$0xff]
    %v619 = vld [vmem:[#allocation3 + $0x68] sm:$0xff]
    %v620 = vld [vmem:[#allocation3 + $0x70] sm:$0xff]
    %v621 = vld [vmem:[#allocation3 + $0x78] sm:$0xff]
    %v622 = vld [vmem:[#allocation3 + $0x80] sm:$0xff]
    %v623 = vld [vmem:[#allocation3 + $0x88] sm:$0xff]
    %v624 = vld [vmem:[#allocation3 + $0x90] sm:$0xff]
    %v625 = vld [vmem:[#allocation3 + $0x98] sm:$0xff]
    %v626 = vld [vmem:[#allocation3 + $0xa0] sm:$0xff]
    %v627 = vld [vmem:[#allocation3 + $0xa8] sm:$0xff]
    %v628 = vld [vmem:[#allocation3 + $0xb0] sm:$0xff]
    %v629 = vld [vmem:[#allocation3 + $0xb8] sm:$0xff]
    %v630 = vld [vmem:[#allocation3 + $0xc0] sm:$0xff]
    %v631 = vld [vmem:[#allocation3 + $0xc8] sm:$0xff]
    %v632 = vld [vmem:[#allocation3 + $0xd0] sm:$0xff]
    %v633 = vld [vmem:[#allocation3 + $0xd8] sm:$0xff]
    %v634 = vld [vmem:[#allocation3 + $0xe0] sm:$0xff]
    %v635 = vld [vmem:[#allocation3 + $0xe8] sm:$0xff]
    %v636 = vld [vmem:[#allocation3 + $0xf0] sm:$0xff]
    %v637 = vld [vmem:[#allocation3 + $0xf8] sm:$0xff]
    %v638 = vld [vmem:[#allocation3 + $0x100] sm:$0xff]
    %v639 = vld [vmem:[#allocation3 + $0x108] sm:$0xff]
    %v640 = vld [vmem:[#allocation3 + $0x110] sm:$0xff]
    %v641 = vld [vmem:[#allocation3 + $0x118] sm:$0xff]
    %v642 = vld [vmem:[#allocation3 + $0x120] sm:$0xff]
    %v643 = vld [vmem:[#allocation3 + $0x128] sm:$0xff]
    %v644 = vld [vmem:[#allocation3 + $0x130] sm:$0xff]
    %v645 = vld [vmem:[#allocation3 + $0x138] sm:$0xff]
    %v646 = vld [vmem:[#allocation3 + $0x140] sm:$0xff]
    %v647 = vld [vmem:[#allocation3 + $0x148] sm:$0xff]
    %v648 = vld [vmem:[#allocation3 + $0x150] sm:$0xff]
    %v649 = vld [vmem:[#allocation3 + $0x158] sm:$0xff]
    %v650 = vld [vmem:[#allocation3 + $0x160] sm:$0xff]
    %v651 = vld [vmem:[#allocation3 + $0x168] sm:$0xff]
    %v652 = vld [vmem:[#allocation3 + $0x170] sm:$0xff]
    %v653 = vld [vmem:[#allocation3 + $0x178] sm:$0xff]
    %v654 = vld [vmem:[%s3] sm:$0xff]
    %656 = vset.pattern.permute.xlu0 0
    %657 = vperm.xlu0 %656, %v654
    %v658 = vpop.permute.xlu0 %657
    %vm660 = vcmask 195584
    %v662 = vsel %vm660, %v605, 0
    %664 = vmatprep.subr.mxu0 %v607
    %665 = vmatpush1.msra.mxu0 %v606
    %666 = vmatprep.subr.mxu0 %v623
    %667 = vmatpush1.msra.mxu0 %v622
    %668 = vmatprep.subr.mxu0 %v639
    %669 = vmatpush1.msra.mxu0 %v638
    %670 = vmatprep.subr.mxu0 0.0
    %671 = vmatpush1.msra.mxu0 0.0
    %672 = vmatprep.subr.mxu0 0.0
    %673 = vmatpush1.msra.mxu0 0.0
    %674 = vmatprep.subr.mxu0 0.0
    %675 = vmatpush1.msra.mxu0 0.0
    %676 = vmatprep.subr.mxu0 0.0
    %677 = vmatpush1.msra.mxu0 0.0
    %678 = vmatprep.subr.mxu0 0.0
    %679 = vmatpush1.msra.mxu0 0.0
    %680 = vmatprep.subr.mxu0 0.0
    %681 = vmatpush1.msra.mxu0 0.0
    %682 = vmatprep.subr.mxu0 0.0
    %683 = vmatpush1.msra.mxu0 0.0
    %684 = vmatprep.subr.mxu0 0.0
    %685 = vmatpush1.msra.mxu0 0.0
    %686 = vmatprep.subr.mxu0 0.0
    %687 = vmatpush1.msra.mxu0 0.0
    %688 = vmatprep.subr.mxu0 0.0
    %689 = vmatpush1.msra.mxu0 0.0
    %690 = vmatprep.subr.mxu0 0.0
    %691 = vmatpush1.msra.mxu0 0.0
    %692 = vmatprep.subr.mxu0 0.0
    %693 = vmatpush1.msra.mxu0 0.0
    %694 = vmatprep.subr.mxu0 0.0
    %695 = vmatpush1.msra.mxu0 0.0
    %696 = vmatprep.subr.mxu0 0.0
    %697 = vmatpush1.msra.mxu0 0.0
    %698 = vmatprep.subr.mxu0 0.0
    %699 = vmatpush1.msra.mxu0 0.0
    %700 = vmatprep.subr.mxu0 0.0
    %701 = vmatpush1.msra.mxu0 0.0
    %702 = vmatprep.subr.mxu0 0.0
    %703 = vmatpush1.msra.mxu0 0.0
    %704 = vmatprep.subr.mxu0 0.0
    %705 = vmatpush1.msra.mxu0 0.0
    %706 = vmatprep.subr.mxu0 0.0
    %707 = vmatpush1.msra.mxu0 0.0
    %708 = vmatprep.subr.mxu0 0.0
    %709 = vmatpush1.msra.mxu0 0.0
    %710 = vmatprep.subr.mxu0 0.0
    %711 = vmatpush1.msra.mxu0 0.0
    %712 = vmatprep.subr.mxu0 0.0
    %713 = vmatpush1.msra.mxu0 0.0
    %714 = vmatprep.subr.mxu0 0.0
    %715 = vmatpush1.msra.mxu0 0.0
    %716 = vmatprep.subr.mxu0 0.0
    %717 = vmatpush1.msra.mxu0 0.0
    %718 = vmatprep.subr.mxu0 0.0
    %719 = vmatpush1.msra.mxu0 0.0
    %720 = vmatprep.subr.mxu0 0.0
    %721 = vmatpush1.msra.mxu0 0.0
    %722 = vmatprep.subr.mxu0 0.0
    %723 = vmatpush1.msra.mxu0 0.0
    %724 = vmatprep.subr.mxu0 0.0
    %725 = vmatpush1.msra.mxu0 0.0
    %726 = vmatprep.subr.mxu0 0.0
    %727 = vmatpush1.msra.mxu0 0.0
    %728 = vmatprep.mubr.f32.mxu0 0.0
    %729 = vmatmul.mubr.f32.gmra.mrb[0].mxu0 %v662
    %v730 = vpop.f32.mrb[0].mxu0
    %v731 = vadd.f32 %v658, %v730
    %v732 = vpop.f32.mrb[0].mxu0
    %v733 = vadd.f32 %v658, %v732
    %734 = vdwg.mxu0
    %735 = vmatprep.subr.mxu0 %v609
    %736 = vmatpush1.msra.mxu0 %v608
    %737 = vmatprep.subr.mxu0 %v625
    %738 = vmatpush1.msra.mxu0 %v624
    %739 = vmatprep.subr.mxu0 %v641
    %740 = vmatpush1.msra.mxu0 %v640
    %741 = vmatprep.subr.mxu0 0.0
    %742 = vmatpush1.msra.mxu0 0.0
    %743 = vmatprep.subr.mxu0 0.0
    %744 = vmatpush1.msra.mxu0 0.0
    %745 = vmatprep.subr.mxu0 0.0
    %746 = vmatpush1.msra.mxu0 0.0
    %747 = vmatprep.subr.mxu0 0.0
    %748 = vmatpush1.msra.mxu0 0.0
    %749 = vmatprep.subr.mxu0 0.0
    %750 = vmatpush1.msra.mxu0 0.0
    %751 = vmatprep.subr.mxu0 0.0
    %752 = vmatpush1.msra.mxu0 0.0
    %753 = vmatprep.subr.mxu0 0.0
    %754 = vmatpush1.msra.mxu0 0.0
    %755 = vmatprep.subr.mxu0 0.0
    %756 = vmatpush1.msra.mxu0 0.0
    %757 = vmatprep.subr.mxu0 0.0
    %758 = vmatpush1.msra.mxu0 0.0
    %759 = vmatprep.subr.mxu0 0.0
    %760 = vmatpush1.msra.mxu0 0.0
    %761 = vmatprep.subr.mxu0 0.0
    %762 = vmatpush1.msra.mxu0 0.0
    %763 = vmatprep.subr.mxu0 0.0
    %764 = vmatpush1.msra.mxu0 0.0
    %765 = vmatprep.subr.mxu0 0.0
    %766 = vmatpush1.msra.mxu0 0.0
    %767 = vmatprep.subr.mxu0 0.0
    %768 = vmatpush1.msra.mxu0 0.0
    %769 = vmatprep.subr.mxu0 0.0
    %770 = vmatpush1.msra.mxu0 0.0
    %771 = vmatprep.subr.mxu0 0.0
    %772 = vmatpush1.msra.mxu0 0.0
    %773 = vmatprep.subr.mxu0 0.0
    %774 = vmatpush1.msra.mxu0 0.0
    %775 = vmatprep.subr.mxu0 0.0
    %776 = vmatpush1.msra.mxu0 0.0
    %777 = vmatprep.subr.mxu0 0.0
    %778 = vmatpush1.msra.mxu0 0.0
    %779 = vmatprep.subr.mxu0 0.0
    %780 = vmatpush1.msra.mxu0 0.0
    %781 = vmatprep.subr.mxu0 0.0
    %782 = vmatpush1.msra.mxu0 0.0
    %783 = vmatprep.subr.mxu0 0.0
    %784 = vmatpush1.msra.mxu0 0.0
    %785 = vmatprep.subr.mxu0 0.0
    %786 = vmatpush1.msra.mxu0 0.0
    %787 = vmatprep.subr.mxu0 0.0
    %788 = vmatpush1.msra.mxu0 0.0
    %789 = vmatprep.subr.mxu0 0.0
    %790 = vmatpush1.msra.mxu0 0.0
    %791 = vmatprep.subr.mxu0 0.0
    %792 = vmatpush1.msra.mxu0 0.0
    %793 = vmatprep.subr.mxu0 0.0
    %794 = vmatpush1.msra.mxu0 0.0
    %795 = vmatprep.subr.mxu0 0.0
    %796 = vmatpush1.msra.mxu0 0.0
    %797 = vmatprep.subr.mxu0 0.0
    %798 = vmatpush1.msra.mxu0 0.0
    %799 = vmatprep.mubr.f32.mxu0 0.0
    %800 = vmatmul.mubr.f32.gmra.mrb[0].mxu0 %v662
    %v801 = vpop.f32.mrb[0].mxu0
    %v802 = vadd.f32 %v658, %v801
    %v803 = vpop.f32.mrb[0].mxu0
    %v804 = vadd.f32 %v658, %v803
    %805 = vdwg.mxu0
    %806 = vmatprep.subr.mxu0 %v611
    %807 = vmatpush1.msra.mxu0 %v610
    %808 = vmatprep.subr.mxu0 %v627
    %809 = vmatpush1.msra.mxu0 %v626
    %810 = vmatprep.subr.mxu0 %v643
    %811 = vmatpush1.msra.mxu0 %v642
    %812 = vmatprep.subr.mxu0 0.0
    %813 = vmatpush1.msra.mxu0 0.0
    %814 = vmatprep.subr.mxu0 0.0
    %815 = vmatpush1.msra.mxu0 0.0
    %816 = vmatprep.subr.mxu0 0.0
    %817 = vmatpush1.msra.mxu0 0.0
    %818 = vmatprep.subr.mxu0 0.0
    %819 = vmatpush1.msra.mxu0 0.0
    %820 = vmatprep.subr.mxu0 0.0
    %821 = vmatpush1.msra.mxu0 0.0
    %822 = vmatprep.subr.mxu0 0.0
    %823 = vmatpush1.msra.mxu0 0.0
    %824 = vmatprep.subr.mxu0 0.0
    %825 = vmatpush1.msra.mxu0 0.0
    %826 = vmatprep.subr.mxu0 0.0
    %827 = vmatpush1.msra.mxu0 0.0
    %828 = vmatprep.subr.mxu0 0.0
    %829 = vmatpush1.msra.mxu0 0.0
    %830 = vmatprep.subr.mxu0 0.0
    %831 = vmatpush1.msra.mxu0 0.0
    %832 = vmatprep.subr.mxu0 0.0
    %833 = vmatpush1.msra.mxu0 0.0
    %834 = vmatprep.subr.mxu0 0.0
    %835 = vmatpush1.msra.mxu0 0.0
    %836 = vmatprep.subr.mxu0 0.0
    %837 = vmatpush1.msra.mxu0 0.0
    %838 = vmatprep.subr.mxu0 0.0
    %839 = vmatpush1.msra.mxu0 0.0
    %840 = vmatprep.subr.mxu0 0.0
    %841 = vmatpush1.msra.mxu0 0.0
    %842 = vmatprep.subr.mxu0 0.0
    %843 = vmatpush1.msra.mxu0 0.0
    %844 = vmatprep.subr.mxu0 0.0
    %845 = vmatpush1.msra.mxu0 0.0
    %846 = vmatprep.subr.mxu0 0.0
    %847 = vmatpush1.msra.mxu0 0.0
    %848 = vmatprep.subr.mxu0 0.0
    %849 = vmatpush1.msra.mxu0 0.0
    %850 = vmatprep.subr.mxu0 0.0
    %851 = vmatpush1.msra.mxu0 0.0
    %852 = vmatprep.subr.mxu0 0.0
    %853 = vmatpush1.msra.mxu0 0.0
    %854 = vmatprep.subr.mxu0 0.0
    %855 = vmatpush1.msra.mxu0 0.0
    %856 = vmatprep.subr.mxu0 0.0
    %857 = vmatpush1.msra.mxu0 0.0
    %858 = vmatprep.subr.mxu0 0.0
    %859 = vmatpush1.msra.mxu0 0.0
    %860 = vmatprep.subr.mxu0 0.0
    %861 = vmatpush1.msra.mxu0 0.0
    %862 = vmatprep.subr.mxu0 0.0
    %863 = vmatpush1.msra.mxu0 0.0
    %864 = vmatprep.subr.mxu0 0.0
    %865 = vmatpush1.msra.mxu0 0.0
    %866 = vmatprep.subr.mxu0 0.0
    %867 = vmatpush1.msra.mxu0 0.0
    %868 = vmatprep.subr.mxu0 0.0
    %869 = vmatpush1.msra.mxu0 0.0
    %870 = vmatprep.mubr.f32.mxu0 0.0
    %871 = vmatmul.mubr.f32.gmra.mrb[0].mxu0 %v662
    %v872 = vpop.f32.mrb[0].mxu0
    %v873 = vadd.f32 %v658, %v872
    %v874 = vpop.f32.mrb[0].mxu0
    %v875 = vadd.f32 %v658, %v874
    %876 = vdwg.mxu0
    %877 = vmatprep.subr.mxu0 %v613
    %878 = vmatpush1.msra.mxu0 %v612
    %879 = vmatprep.subr.mxu0 %v629
    %880 = vmatpush1.msra.mxu0 %v628
    %881 = vmatprep.subr.mxu0 %v645
    %882 = vmatpush1.msra.mxu0 %v644
    %883 = vmatprep.subr.mxu0 0.0
    %884 = vmatpush1.msra.mxu0 0.0
    %885 = vmatprep.subr.mxu0 0.0
    %886 = vmatpush1.msra.mxu0 0.0
    %887 = vmatprep.subr.mxu0 0.0
    %888 = vmatpush1.msra.mxu0 0.0
    %889 = vmatprep.subr.mxu0 0.0
    %890 = vmatpush1.msra.mxu0 0.0
    %891 = vmatprep.subr.mxu0 0.0
    %892 = vmatpush1.msra.mxu0 0.0
    %893 = vmatprep.subr.mxu0 0.0
    %894 = vmatpush1.msra.mxu0 0.0
    %895 = vmatprep.subr.mxu0 0.0
    %896 = vmatpush1.msra.mxu0 0.0
    %897 = vmatprep.subr.mxu0 0.0
    %898 = vmatpush1.msra.mxu0 0.0
    %899 = vmatprep.subr.mxu0 0.0
    %900 = vmatpush1.msra.mxu0 0.0
    %901 = vmatprep.subr.mxu0 0.0
    %902 = vmatpush1.msra.mxu0 0.0
    %903 = vmatprep.subr.mxu0 0.0
    %904 = vmatpush1.msra.mxu0 0.0
    %905 = vmatprep.subr.mxu0 0.0
    %906 = vmatpush1.msra.mxu0 0.0
    %907 = vmatprep.subr.mxu0 0.0
    %908 = vmatpush1.msra.mxu0 0.0
    %909 = vmatprep.subr.mxu0 0.0
    %910 = vmatpush1.msra.mxu0 0.0
    %911 = vmatprep.subr.mxu0 0.0
    %912 = vmatpush1.msra.mxu0 0.0
    %913 = vmatprep.subr.mxu0 0.0
    %914 = vmatpush1.msra.mxu0 0.0
    %915 = vmatprep.subr.mxu0 0.0
    %916 = vmatpush1.msra.mxu0 0.0
    %917 = vmatprep.subr.mxu0 0.0
    %918 = vmatpush1.msra.mxu0 0.0
    %919 = vmatprep.subr.mxu0 0.0
    %920 = vmatpush1.msra.mxu0 0.0
    %921 = vmatprep.subr.mxu0 0.0
    %922 = vmatpush1.msra.mxu0 0.0
    %923 = vmatprep.subr.mxu0 0.0
    %924 = vmatpush1.msra.mxu0 0.0
    %925 = vmatprep.subr.mxu0 0.0
    %926 = vmatpush1.msra.mxu0 0.0
    %927 = vmatprep.subr.mxu0 0.0
    %928 = vmatpush1.msra.mxu0 0.0
    %929 = vmatprep.subr.mxu0 0.0
    %930 = vmatpush1.msra.mxu0 0.0
    %931 = vmatprep.subr.mxu0 0.0
    %932 = vmatpush1.msra.mxu0 0.0
    %933 = vmatprep.subr.mxu0 0.0
    %934 = vmatpush1.msra.mxu0 0.0
    %935 = vmatprep.subr.mxu0 0.0
    %936 = vmatpush1.msra.mxu0 0.0
    %937 = vmatprep.subr.mxu0 0.0
    %938 = vmatpush1.msra.mxu0 0.0
    %939 = vmatprep.subr.mxu0 0.0
    %940 = vmatpush1.msra.mxu0 0.0
    %941 = vmatprep.mubr.f32.mxu0 0.0
    %942 = vmatmul.mubr.f32.gmra.mrb[0].mxu0 %v662
    %v943 = vpop.f32.mrb[0].mxu0
    %v944 = vadd.f32 %v658, %v943
    %v945 = vpop.f32.mrb[0].mxu0
    %v946 = vadd.f32 %v658, %v945
    %947 = vdwg.mxu0
    %948 = vmatprep.subr.mxu0 %v615
    %949 = vmatpush1.msra.mxu0 %v614
    %950 = vmatprep.subr.mxu0 %v631
    %951 = vmatpush1.msra.mxu0 %v630
    %952 = vmatprep.subr.mxu0 %v647
    %953 = vmatpush1.msra.mxu0 %v646
    %954 = vmatprep.subr.mxu0 0.0
    %955 = vmatpush1.msra.mxu0 0.0
    %956 = vmatprep.subr.mxu0 0.0
    %957 = vmatpush1.msra.mxu0 0.0
    %958 = vmatprep.subr.mxu0 0.0
    %959 = vmatpush1.msra.mxu0 0.0
    %960 = vmatprep.subr.mxu0 0.0
    %961 = vmatpush1.msra.mxu0 0.0
    %962 = vmatprep.subr.mxu0 0.0
    %963 = vmatpush1.msra.mxu0 0.0
    %964 = vmatprep.subr.mxu0 0.0
    %965 = vmatpush1.msra.mxu0 0.0
    %966 = vmatprep.subr.mxu0 0.0
    %967 = vmatpush1.msra.mxu0 0.0
    %968 = vmatprep.subr.mxu0 0.0
    %969 = vmatpush1.msra.mxu0 0.0
    %970 = vmatprep.subr.mxu0 0.0
    %971 = vmatpush1.msra.mxu0 0.0
    %972 = vmatprep.subr.mxu0 0.0
    %973 = vmatpush1.msra.mxu0 0.0
    %974 = vmatprep.subr.mxu0 0.0
    %975 = vmatpush1.msra.mxu0 0.0
    %976 = vmatprep.subr.mxu0 0.0
    %977 = vmatpush1.msra.mxu0 0.0
    %978 = vmatprep.subr.mxu0 0.0
    %979 = vmatpush1.msra.mxu0 0.0
    %980 = vmatprep.subr.mxu0 0.0
    %981 = vmatpush1.msra.mxu0 0.0
    %982 = vmatprep.subr.mxu0 0.0
    %983 = vmatpush1.msra.mxu0 0.0
    %984 = vmatprep.subr.mxu0 0.0
    %985 = vmatpush1.msra.mxu0 0.0
    %986 = vmatprep.subr.mxu0 0.0
    %987 = vmatpush1.msra.mxu0 0.0
    %988 = vmatprep.subr.mxu0 0.0
    %989 = vmatpush1.msra.mxu0 0.0
    %990 = vmatprep.subr.mxu0 0.0
    %991 = vmatpush1.msra.mxu0 0.0
    %992 = vmatprep.subr.mxu0 0.0
    %993 = vmatpush1.msra.mxu0 0.0
    %994 = vmatprep.subr.mxu0 0.0
    %995 = vmatpush1.msra.mxu0 0.0
    %996 = vmatprep.subr.mxu0 0.0
    %997 = vmatpush1.msra.mxu0 0.0
    %998 = vmatprep.subr.mxu0 0.0
    %999 = vmatpush1.msra.mxu0 0.0
    %1000 = vmatprep.subr.mxu0 0.0
    %1001 = vmatpush1.msra.mxu0 0.0
    %1002 = vmatprep.subr.mxu0 0.0
    %1003 = vmatpush1.msra.mxu0 0.0
    %1004 = vmatprep.subr.mxu0 0.0
    %1005 = vmatpush1.msra.mxu0 0.0
    %1006 = vmatprep.subr.mxu0 0.0
    %1007 = vmatpush1.msra.mxu0 0.0
    %1008 = vmatprep.subr.mxu0 0.0
    %1009 = vmatpush1.msra.mxu0 0.0
    %1010 = vmatprep.subr.mxu0 0.0
    %1011 = vmatpush1.msra.mxu0 0.0
    %1012 = vmatprep.mubr.f32.mxu0 0.0
    %1013 = vmatmul.mubr.f32.gmra.mrb[0].mxu0 %v662
    %v1014 = vpop.f32.mrb[0].mxu0
    %v1015 = vadd.f32 %v658, %v1014
    %v1016 = vpop.f32.mrb[0].mxu0
    %v1017 = vadd.f32 %v658, %v1016
    %1018 = vdwg.mxu0
    %1019 = vmatprep.subr.mxu0 %v617
    %1020 = vmatpush1.msra.mxu0 %v616
    %1021 = vmatprep.subr.mxu0 %v633
    %1022 = vmatpush1.msra.mxu0 %v632
    %1023 = vmatprep.subr.mxu0 %v649
    %1024 = vmatpush1.msra.mxu0 %v648
    %1025 = vmatprep.subr.mxu0 0.0
    %1026 = vmatpush1.msra.mxu0 0.0
    %1027 = vmatprep.subr.mxu0 0.0
    %1028 = vmatpush1.msra.mxu0 0.0
    %1029 = vmatprep.subr.mxu0 0.0
    %1030 = vmatpush1.msra.mxu0 0.0
    %1031 = vmatprep.subr.mxu0 0.0
    %1032 = vmatpush1.msra.mxu0 0.0
    %1033 = vmatprep.subr.mxu0 0.0
    %1034 = vmatpush1.msra.mxu0 0.0
    %1035 = vmatprep.subr.mxu0 0.0
    %1036 = vmatpush1.msra.mxu0 0.0
    %1037 = vmatprep.subr.mxu0 0.0
    %1038 = vmatpush1.msra.mxu0 0.0
    %1039 = vmatprep.subr.mxu0 0.0
    %1040 = vmatpush1.msra.mxu0 0.0
    %1041 = vmatprep.subr.mxu0 0.0
    %1042 = vmatpush1.msra.mxu0 0.0
    %1043 = vmatprep.subr.mxu0 0.0
    %1044 = vmatpush1.msra.mxu0 0.0
    %1045 = vmatprep.subr.mxu0 0.0
    %1046 = vmatpush1.msra.mxu0 0.0
    %1047 = vmatprep.subr.mxu0 0.0
    %1048 = vmatpush1.msra.mxu0 0.0
    %1049 = vmatprep.subr.mxu0 0.0
    %1050 = vmatpush1.msra.mxu0 0.0
    %1051 = vmatprep.subr.mxu0 0.0
    %1052 = vmatpush1.msra.mxu0 0.0
    %1053 = vmatprep.subr.mxu0 0.0
    %1054 = vmatpush1.msra.mxu0 0.0
    %1055 = vmatprep.subr.mxu0 0.0
    %1056 = vmatpush1.msra.mxu0 0.0
    %1057 = vmatprep.subr.mxu0 0.0
    %1058 = vmatpush1.msra.mxu0 0.0
    %1059 = vmatprep.subr.mxu0 0.0
    %1060 = vmatpush1.msra.mxu0 0.0
    %1061 = vmatprep.subr.mxu0 0.0
    %1062 = vmatpush1.msra.mxu0 0.0
    %1063 = vmatprep.subr.mxu0 0.0
    %1064 = vmatpush1.msra.mxu0 0.0
    %1065 = vmatprep.subr.mxu0 0.0
    %1066 = vmatpush1.msra.mxu0 0.0
    %1067 = vmatprep.subr.mxu0 0.0
    %1068 = vmatpush1.msra.mxu0 0.0
    %1069 = vmatprep.subr.mxu0 0.0
    %1070 = vmatpush1.msra.mxu0 0.0
    %1071 = vmatprep.subr.mxu0 0.0
    %1072 = vmatpush1.msra.mxu0 0.0
    %1073 = vmatprep.subr.mxu0 0.0
    %1074 = vmatpush1.msra.mxu0 0.0
    %1075 = vmatprep.subr.mxu0 0.0
    %1076 = vmatpush1.msra.mxu0 0.0
    %1077 = vmatprep.subr.mxu0 0.0
    %1078 = vmatpush1.msra.mxu0 0.0
    %1079 = vmatprep.subr.mxu0 0.0
    %1080 = vmatpush1.msra.mxu0 0.0
    %1081 = vmatprep.subr.mxu0 0.0
    %1082 = vmatpush1.msra.mxu0 0.0
    %1083 = vmatprep.mubr.f32.mxu0 0.0
    %1084 = vmatmul.mubr.f32.gmra.mrb[0].mxu0 %v662
    %v1085 = vpop.f32.mrb[0].mxu0
    %v1086 = vadd.f32 %v658, %v1085
    %v1087 = vpop.f32.mrb[0].mxu0
    %v1088 = vadd.f32 %v658, %v1087
    %1089 = vdwg.mxu0
    %1090 = vmatprep.subr.mxu0 %v619
    %1091 = vmatpush1.msra.mxu0 %v618
    %1092 = vmatprep.subr.mxu0 %v635
    %1093 = vmatpush1.msra.mxu0 %v634
    %1094 = vmatprep.subr.mxu0 %v651
    %1095 = vmatpush1.msra.mxu0 %v650
    %1096 = vmatprep.subr.mxu0 0.0
    %1097 = vmatpush1.msra.mxu0 0.0
    %1098 = vmatprep.subr.mxu0 0.0
    %1099 = vmatpush1.msra.mxu0 0.0
    %1100 = vmatprep.subr.mxu0 0.0
    %1101 = vmatpush1.msra.mxu0 0.0
    %1102 = vmatprep.subr.mxu0 0.0
    %1103 = vmatpush1.msra.mxu0 0.0
    %1104 = vmatprep.subr.mxu0 0.0
    %1105 = vmatpush1.msra.mxu0 0.0
    %1106 = vmatprep.subr.mxu0 0.0
    %1107 = vmatpush1.msra.mxu0 0.0
    %1108 = vmatprep.subr.mxu0 0.0
    %1109 = vmatpush1.msra.mxu0 0.0
    %1110 = vmatprep.subr.mxu0 0.0
    %1111 = vmatpush1.msra.mxu0 0.0
    %1112 = vmatprep.subr.mxu0 0.0
    %1113 = vmatpush1.msra.mxu0 0.0
    %1114 = vmatprep.subr.mxu0 0.0
    %1115 = vmatpush1.msra.mxu0 0.0
    %1116 = vmatprep.subr.mxu0 0.0
    %1117 = vmatpush1.msra.mxu0 0.0
    %1118 = vmatprep.subr.mxu0 0.0
    %1119 = vmatpush1.msra.mxu0 0.0
    %1120 = vmatprep.subr.mxu0 0.0
    %1121 = vmatpush1.msra.mxu0 0.0
    %1122 = vmatprep.subr.mxu0 0.0
    %1123 = vmatpush1.msra.mxu0 0.0
    %1124 = vmatprep.subr.mxu0 0.0
    %1125 = vmatpush1.msra.mxu0 0.0
    %1126 = vmatprep.subr.mxu0 0.0
    %1127 = vmatpush1.msra.mxu0 0.0
    %1128 = vmatprep.subr.mxu0 0.0
    %1129 = vmatpush1.msra.mxu0 0.0
    %1130 = vmatprep.subr.mxu0 0.0
    %1131 = vmatpush1.msra.mxu0 0.0
    %1132 = vmatprep.subr.mxu0 0.0
    %1133 = vmatpush1.msra.mxu0 0.0
    %1134 = vmatprep.subr.mxu0 0.0
    %1135 = vmatpush1.msra.mxu0 0.0
    %1136 = vmatprep.subr.mxu0 0.0
    %1137 = vmatpush1.msra.mxu0 0.0
    %1138 = vmatprep.subr.mxu0 0.0
    %1139 = vmatpush1.msra.mxu0 0.0
    %1140 = vmatprep.subr.mxu0 0.0
    %1141 = vmatpush1.msra.mxu0 0.0
    %1142 = vmatprep.subr.mxu0 0.0
    %1143 = vmatpush1.msra.mxu0 0.0
    %1144 = vmatprep.subr.mxu0 0.0
    %1145 = vmatpush1.msra.mxu0 0.0
    %1146 = vmatprep.subr.mxu0 0.0
    %1147 = vmatpush1.msra.mxu0 0.0
    %1148 = vmatprep.subr.mxu0 0.0
    %1149 = vmatpush1.msra.mxu0 0.0
    %1150 = vmatprep.subr.mxu0 0.0
    %1151 = vmatpush1.msra.mxu0 0.0
    %1152 = vmatprep.subr.mxu0 0.0
    %1153 = vmatpush1.msra.mxu0 0.0
    %1154 = vmatprep.mubr.f32.mxu0 0.0
    %1155 = vmatmul.mubr.f32.gmra.mrb[0].mxu0 %v662
    %v1156 = vpop.f32.mrb[0].mxu0
    %v1157 = vadd.f32 %v658, %v1156
    %v1158 = vpop.f32.mrb[0].mxu0
    %v1159 = vadd.f32 %v658, %v1158
    %1160 = vdwg.mxu0
    %1161 = vmatprep.subr.mxu0 %v621
    %1162 = vmatpush1.msra.mxu0 %v620
    %1163 = vmatprep.subr.mxu0 %v637
    %1164 = vmatpush1.msra.mxu0 %v636
    %1165 = vmatprep.subr.mxu0 %v653
    %1166 = vmatpush1.msra.mxu0 %v652
    %1167 = vmatprep.subr.mxu0 0.0
    %1168 = vmatpush1.msra.mxu0 0.0
    %1169 = vmatprep.subr.mxu0 0.0
    %1170 = vmatpush1.msra.mxu0 0.0
    %1171 = vmatprep.subr.mxu0 0.0
    %1172 = vmatpush1.msra.mxu0 0.0
    %1173 = vmatprep.subr.mxu0 0.0
    %1174 = vmatpush1.msra.mxu0 0.0
    %1175 = vmatprep.subr.mxu0 0.0
    %1176 = vmatpush1.msra.mxu0 0.0
    %1177 = vmatprep.subr.mxu0 0.0
    %1178 = vmatpush1.msra.mxu0 0.0
    %1179 = vmatprep.subr.mxu0 0.0
    %1180 = vmatpush1.msra.mxu0 0.0
    %1181 = vmatprep.subr.mxu0 0.0
    %1182 = vmatpush1.msra.mxu0 0.0
    %1183 = vmatprep.subr.mxu0 0.0
    %1184 = vmatpush1.msra.mxu0 0.0
    %1185 = vmatprep.subr.mxu0 0.0
    %1186 = vmatpush1.msra.mxu0 0.0
    %1187 = vmatprep.subr.mxu0 0.0
    %1188 = vmatpush1.msra.mxu0 0.0
    %1189 = vmatprep.subr.mxu0 0.0
    %1190 = vmatpush1.msra.mxu0 0.0
    %1191 = vmatprep.subr.mxu0 0.0
    %1192 = vmatpush1.msra.mxu0 0.0
    %1193 = vmatprep.subr.mxu0 0.0
    %1194 = vmatpush1.msra.mxu0 0.0
    %1195 = vmatprep.subr.mxu0 0.0
    %1196 = vmatpush1.msra.mxu0 0.0
    %1197 = vmatprep.subr.mxu0 0.0
    %1198 = vmatpush1.msra.mxu0 0.0
    %1199 = vmatprep.subr.mxu0 0.0
    %1200 = vmatpush1.msra.mxu0 0.0
    %1201 = vmatprep.subr.mxu0 0.0
    %1202 = vmatpush1.msra.mxu0 0.0
    %1203 = vmatprep.subr.mxu0 0.0
    %1204 = vmatpush1.msra.mxu0 0.0
    %1205 = vmatprep.subr.mxu0 0.0
    %1206 = vmatpush1.msra.mxu0 0.0
    %1207 = vmatprep.subr.mxu0 0.0
    %1208 = vmatpush1.msra.mxu0 0.0
    %1209 = vmatprep.subr.mxu0 0.0
    %1210 = vmatpush1.msra.mxu0 0.0
    %1211 = vmatprep.subr.mxu0 0.0
    %1212 = vmatpush1.msra.mxu0 0.0
    %1213 = vmatprep.subr.mxu0 0.0
    %1214 = vmatpush1.msra.mxu0 0.0
    %1215 = vmatprep.subr.mxu0 0.0
    %1216 = vmatpush1.msra.mxu0 0.0
    %1217 = vmatprep.subr.mxu0 0.0
    %1218 = vmatpush1.msra.mxu0 0.0
    %1219 = vmatprep.subr.mxu0 0.0
    %1220 = vmatpush1.msra.mxu0 0.0
    %1221 = vmatprep.subr.mxu0 0.0
    %1222 = vmatpush1.msra.mxu0 0.0
    %1223 = vmatprep.subr.mxu0 0.0
    %1224 = vmatpush1.msra.mxu0 0.0
    %1225 = vmatprep.mubr.f32.mxu0 0.0
    %1226 = vmatmul.mubr.f32.gmra.mrb[0].mxu0 %v662
    %v1227 = vpop.f32.mrb[0].mxu0
    %v1228 = vadd.f32 %v658, %v1227
    %v1229 = vpop.f32.mrb[0].mxu0
    %v1230 = vadd.f32 %v658, %v1229
    %1231 = vdwg.mxu0
    %v1232 = vmax.f32 %v731, 0.0
    %v1233 = vmax.f32 %v733, 0.0
    %v1234 = vmax.f32 %v802, 0.0
    %v1235 = vmax.f32 %v804, 0.0
    %v1236 = vmax.f32 %v873, 0.0
    %v1237 = vmax.f32 %v875, 0.0
    %v1238 = vmax.f32 %v944, 0.0
    %v1239 = vmax.f32 %v946, 0.0
    %v1240 = vmax.f32 %v1015, 0.0
    %v1241 = vmax.f32 %v1017, 0.0
    %v1242 = vmax.f32 %v1086, 0.0
    %v1243 = vmax.f32 %v1088, 0.0
    %v1244 = vmax.f32 %v1157, 0.0
    %v1245 = vmax.f32 %v1159, 0.0
    %v1246 = vmax.f32 %v1228, 0.0
    %v1247 = vmax.f32 %v1230, 0.0
    %v1248 = vsel %vm308, 1, 0
    %v1249 = vsel %vm309, 1, 0
    %v1250 = vsel %vm310, 1, 0
    %v1251 = vsel %vm311, 1, 0
    %v1252 = vsel %vm312, 1, 0
    %v1253 = vsel %vm313, 1, 0
    %v1254 = vsel %vm314, 1, 0
    %v1255 = vsel %vm315, 1, 0
    %v1256 = vsel %vm316, 1, 0
    %v1257 = vsel %vm317, 1, 0
    %v1258 = vsel %vm318, 1, 0
    %v1259 = vsel %vm319, 1, 0
    %v1260 = vsel %vm320, 1, 0
    %v1261 = vsel %vm321, 1, 0
    %v1262 = vsel %vm322, 1, 0
    %v1263 = vsel %vm323, 1, 0
    %vm1264 = vcmp.eq.s32.totalorder %v1248, 1
    %vm1265 = vcmp.eq.s32.totalorder %v1249, 1
    %vm1266 = vcmp.eq.s32.totalorder %v1250, 1
    %vm1267 = vcmp.eq.s32.totalorder %v1251, 1
    %vm1268 = vcmp.eq.s32.totalorder %v1252, 1
    %vm1269 = vcmp.eq.s32.totalorder %v1253, 1
    %vm1270 = vcmp.eq.s32.totalorder %v1254, 1
    %vm1271 = vcmp.eq.s32.totalorder %v1255, 1
    %vm1272 = vcmp.eq.s32.totalorder %v1256, 1
    %vm1273 = vcmp.eq.s32.totalorder %v1257, 1
    %vm1274 = vcmp.eq.s32.totalorder %v1258, 1
    %vm1275 = vcmp.eq.s32.totalorder %v1259, 1
    %vm1276 = vcmp.eq.s32.totalorder %v1260, 1
    %vm1277 = vcmp.eq.s32.totalorder %v1261, 1
    %vm1278 = vcmp.eq.s32.totalorder %v1262, 1
    %vm1279 = vcmp.eq.s32.totalorder %v1263, 1
    %v1280 = vsel %vm1264, %v1232, 0.0
    %v1281 = vsel %vm1265, %v1233, 0.0
    %v1282 = vsel %vm1266, %v1234, 0.0
    %v1283 = vsel %vm1267, %v1235, 0.0
    %v1284 = vsel %vm1268, %v1236, 0.0
    %v1285 = vsel %vm1269, %v1237, 0.0
    %v1286 = vsel %vm1270, %v1238, 0.0
    %v1287 = vsel %vm1271, %v1239, 0.0
    %v1288 = vsel %vm1272, %v1240, 0.0
    %v1289 = vsel %vm1273, %v1241, 0.0
    %v1290 = vsel %vm1274, %v1242, 0.0
    %v1291 = vsel %vm1275, %v1243, 0.0
    %v1292 = vsel %vm1276, %v1244, 0.0
    %v1293 = vsel %vm1277, %v1245, 0.0
    %v1294 = vsel %vm1278, %v1246, 0.0
    %v1295 = vsel %vm1279, %v1247, 0.0
    %1296 = vst [vmem:[#allocation2] sm:$0xff] %v1280
    %1297 = vst [vmem:[#allocation2 + $0x8] sm:$0xff] %v1281
    %1298 = vst [vmem:[#allocation2 + $0x10] sm:$0xff] %v1282
    %1299 = vst [vmem:[#allocation2 + $0x18] sm:$0xff] %v1283
    %1300 = vst [vmem:[#allocation2 + $0x20] sm:$0xff] %v1284
    %1301 = vst [vmem:[#allocation2 + $0x28] sm:$0xff] %v1285
    %1302 = vst [vmem:[#allocation2 + $0x30] sm:$0xff] %v1286
    %1303 = vst [vmem:[#allocation2 + $0x38] sm:$0xff] %v1287
    %1304 = vst [vmem:[#allocation2 + $0x40] sm:$0xff] %v1288
    %1305 = vst [vmem:[#allocation2 + $0x48] sm:$0xff] %v1289
    %1306 = vst [vmem:[#allocation2 + $0x50] sm:$0xff] %v1290
    %1307 = vst [vmem:[#allocation2 + $0x58] sm:$0xff] %v1291
    %1308 = vst [vmem:[#allocation2 + $0x60] sm:$0xff] %v1292
    %1309 = vst [vmem:[#allocation2 + $0x68] sm:$0xff] %v1293
    %1310 = vst [vmem:[#allocation2 + $0x70] sm:$0xff] %v1294
    %1311 = vst [vmem:[#allocation2 + $0x78] sm:$0xff] %v1295
    %v1312 = vld [vmem:[#allocation2] sm:$0xff]
    %v1313 = vld [vmem:[#allocation2 + $0x8] sm:$0xff]
    %v1314 = vld [vmem:[#allocation2 + $0x10] sm:$0xff]
    %v1315 = vld [vmem:[#allocation2 + $0x18] sm:$0xff]
    %v1316 = vld [vmem:[#allocation2 + $0x20] sm:$0xff]
    %v1317 = vld [vmem:[#allocation2 + $0x28] sm:$0xff]
    %v1318 = vld [vmem:[#allocation2 + $0x30] sm:$0xff]
    %v1319 = vld [vmem:[#allocation2 + $0x38] sm:$0xff]
    %v1320 = vld [vmem:[#allocation2 + $0x40] sm:$0xff]
    %v1321 = vld [vmem:[#allocation2 + $0x48] sm:$0xff]
    %v1322 = vld [vmem:[#allocation2 + $0x50] sm:$0xff]
    %v1323 = vld [vmem:[#allocation2 + $0x58] sm:$0xff]
    %v1324 = vld [vmem:[#allocation2 + $0x60] sm:$0xff]
    %v1325 = vld [vmem:[#allocation2 + $0x68] sm:$0xff]
    %v1326 = vld [vmem:[#allocation2 + $0x70] sm:$0xff]
    %v1327 = vld [vmem:[#allocation2 + $0x78] sm:$0xff]
    %1344 = vrot.lane.b32.xlu0 %v1312, 4
    %v1345 = vpop.permute.xlu0 %1344
    %1346 = vrot.lane.b32.xlu0 %v1313, 4
    %v1347 = vpop.permute.xlu0 %1346
    %1348 = vrot.lane.b32.xlu0 %v1314, 4
    %v1349 = vpop.permute.xlu0 %1348
    %1350 = vrot.lane.b32.xlu0 %v1315, 4
    %v1351 = vpop.permute.xlu0 %1350
    %1352 = vrot.lane.b32.xlu0 %v1316, 4
    %v1353 = vpop.permute.xlu0 %1352
    %1354 = vrot.lane.b32.xlu0 %v1317, 4
    %v1355 = vpop.permute.xlu0 %1354
    %1356 = vrot.lane.b32.xlu0 %v1318, 4
    %v1357 = vpop.permute.xlu0 %1356
    %1358 = vrot.lane.b32.xlu0 %v1319, 4
    %v1359 = vpop.permute.xlu0 %1358
    %1360 = vrot.lane.b32.xlu0 %v1320, 4
    %v1361 = vpop.permute.xlu0 %1360
    %1362 = vrot.lane.b32.xlu0 %v1321, 4
    %v1363 = vpop.permute.xlu0 %1362
    %1364 = vrot.lane.b32.xlu0 %v1322, 4
    %v1365 = vpop.permute.xlu0 %1364
    %1366 = vrot.lane.b32.xlu0 %v1323, 4
    %v1367 = vpop.permute.xlu0 %1366
    %1368 = vrot.lane.b32.xlu0 %v1324, 4
    %v1369 = vpop.permute.xlu0 %1368
    %1370 = vrot.lane.b32.xlu0 %v1325, 4
    %v1371 = vpop.permute.xlu0 %1370
    %1372 = vrot.lane.b32.xlu0 %v1326, 4
    %v1373 = vpop.permute.xlu0 %1372
    %1374 = vrot.lane.b32.xlu0 %v1327, 4
    %v1375 = vpop.permute.xlu0 %1374
    %vm1376 = vcmask 31744
    %v1377 = vsel %vm1376, %v1345, %v1347
    %v1378 = vsel %vm1376, %v1347, %v1349
    %v1379 = vsel %vm1376, %v1349, %v1351
    %v1380 = vsel %vm1376, %v1351, %v1353
    %v1381 = vsel %vm1376, %v1353, %v1355
    %v1382 = vsel %vm1376, %v1355, %v1357
    %v1383 = vsel %vm1376, %v1357, %v1359
    %v1384 = vsel %vm1376, %v1359, %v1361
    %v1385 = vsel %vm1376, %v1361, %v1363
    %v1386 = vsel %vm1376, %v1363, %v1365
    %v1387 = vsel %vm1376, %v1365, %v1367
    %v1388 = vsel %vm1376, %v1367, %v1369
    %v1389 = vsel %vm1376, %v1369, %v1371
    %v1390 = vsel %vm1376, %v1371, %v1373
    %v1391 = vsel %vm1376, %v1373, %v1375
    %vm1408 = vcmask 1047584
    %1409 = vst.msk [vmem:[#allocation3] sm:$0xff] %vm1408, %v1345
    %1410 = vst [vmem:[#allocation3 + $0x8] sm:$0xff] %v1377
    %1411 = vst [vmem:[#allocation3 + $0x10] sm:$0xff] %v1378
    %1412 = vst [vmem:[#allocation3 + $0x18] sm:$0xff] %v1379
    %1413 = vst [vmem:[#allocation3 + $0x20] sm:$0xff] %v1380
    %1414 = vst [vmem:[#allocation3 + $0x28] sm:$0xff] %v1381
    %1415 = vst [vmem:[#allocation3 + $0x30] sm:$0xff] %v1382
    %1416 = vst [vmem:[#allocation3 + $0x38] sm:$0xff] %v1383
    %1417 = vst [vmem:[#allocation3 + $0x40] sm:$0xff] %v1384
    %1418 = vst [vmem:[#allocation3 + $0x48] sm:$0xff] %v1385
    %1419 = vst [vmem:[#allocation3 + $0x50] sm:$0xff] %v1386
    %1420 = vst [vmem:[#allocation3 + $0x58] sm:$0xff] %v1387
    %1421 = vst [vmem:[#allocation3 + $0x60] sm:$0xff] %v1388
    %1422 = vst [vmem:[#allocation3 + $0x68] sm:$0xff] %v1389
    %1423 = vst [vmem:[#allocation3 + $0x70] sm:$0xff] %v1390
    %1424 = vst [vmem:[#allocation3 + $0x78] sm:$0xff] %v1391
    %v1425 = vld [vmem:[#allocation2] sm:$0xff]
    %v1426 = vld [vmem:[#allocation2 + $0x8] sm:$0xff]
    %v1427 = vld [vmem:[#allocation2 + $0x10] sm:$0xff]
    %v1428 = vld [vmem:[#allocation2 + $0x18] sm:$0xff]
    %v1429 = vld [vmem:[#allocation2 + $0x20] sm:$0xff]
    %v1430 = vld [vmem:[#allocation2 + $0x28] sm:$0xff]
    %v1431 = vld [vmem:[#allocation2 + $0x30] sm:$0xff]
    %v1432 = vld [vmem:[#allocation2 + $0x38] sm:$0xff]
    %v1433 = vld [vmem:[#allocation2 + $0x40] sm:$0xff]
    %v1434 = vld [vmem:[#allocation2 + $0x48] sm:$0xff]
    %v1435 = vld [vmem:[#allocation2 + $0x50] sm:$0xff]
    %v1436 = vld [vmem:[#allocation2 + $0x58] sm:$0xff]
    %v1437 = vld [vmem:[#allocation2 + $0x60] sm:$0xff]
    %v1438 = vld [vmem:[#allocation2 + $0x68] sm:$0xff]
    %v1439 = vld [vmem:[#allocation2 + $0x70] sm:$0xff]
    %v1440 = vld [vmem:[#allocation2 + $0x78] sm:$0xff]
    %1457 = vrot.lane.b32.xlu0 %v1425, 2
    %v1458 = vpop.permute.xlu0 %1457
    %1459 = vrot.lane.b32.xlu0 %v1426, 2
    %v1460 = vpop.permute.xlu0 %1459
    %1461 = vrot.lane.b32.xlu0 %v1427, 2
    %v1462 = vpop.permute.xlu0 %1461
    %1463 = vrot.lane.b32.xlu0 %v1428, 2
    %v1464 = vpop.permute.xlu0 %1463
    %1465 = vrot.lane.b32.xlu0 %v1429, 2
    %v1466 = vpop.permute.xlu0 %1465
    %1467 = vrot.lane.b32.xlu0 %v1430, 2
    %v1468 = vpop.permute.xlu0 %1467
    %1469 = vrot.lane.b32.xlu0 %v1431, 2
    %v1470 = vpop.permute.xlu0 %1469
    %1471 = vrot.lane.b32.xlu0 %v1432, 2
    %v1472 = vpop.permute.xlu0 %1471
    %1473 = vrot.lane.b32.xlu0 %v1433, 2
    %v1474 = vpop.permute.xlu0 %1473
    %1475 = vrot.lane.b32.xlu0 %v1434, 2
    %v1476 = vpop.permute.xlu0 %1475
    %1477 = vrot.lane.b32.xlu0 %v1435, 2
    %v1478 = vpop.permute.xlu0 %1477
    %1479 = vrot.lane.b32.xlu0 %v1436, 2
    %v1480 = vpop.permute.xlu0 %1479
    %1481 = vrot.lane.b32.xlu0 %v1437, 2
    %v1482 = vpop.permute.xlu0 %1481
    %1483 = vrot.lane.b32.xlu0 %v1438, 2
    %v1484 = vpop.permute.xlu0 %1483
    %1485 = vrot.lane.b32.xlu0 %v1439, 2
    %v1486 = vpop.permute.xlu0 %1485
    %1487 = vrot.lane.b32.xlu0 %v1440, 2
    %v1488 = vpop.permute.xlu0 %1487
    %v1489 = vsel %vm411, %v1458, %v1460
    %v1490 = vsel %vm411, %v1460, %v1462
    %v1491 = vsel %vm411, %v1462, %v1464
    %v1492 = vsel %vm411, %v1464, %v1466
    %v1493 = vsel %vm411, %v1466, %v1468
    %v1494 = vsel %vm411, %v1468, %v1470
    %v1495 = vsel %vm411, %v1470, %v1472
    %v1496 = vsel %vm411, %v1472, %v1474
    %v1497 = vsel %vm411, %v1474, %v1476
    %v1498 = vsel %vm411, %v1476, %v1478
    %v1499 = vsel %vm411, %v1478, %v1480
    %v1500 = vsel %vm411, %v1480, %v1482
    %v1501 = vsel %vm411, %v1482, %v1484
    %v1502 = vsel %vm411, %v1484, %v1486
    %v1503 = vsel %vm411, %v1486, %v1488
    %vm1520 = vcmask 1047568
    %1521 = vst.msk [vmem:[#allocation3 + $0x80] sm:$0xff] %vm1520, %v1458
    %1522 = vst [vmem:[#allocation3 + $0x88] sm:$0xff] %v1489
    %1523 = vst [vmem:[#allocation3 + $0x90] sm:$0xff] %v1490
    %1524 = vst [vmem:[#allocation3 + $0x98] sm:$0xff] %v1491
    %1525 = vst [vmem:[#allocation3 + $0xa0] sm:$0xff] %v1492
    %1526 = vst [vmem:[#allocation3 + $0xa8] sm:$0xff] %v1493
    %1527 = vst [vmem:[#allocation3 + $0xb0] sm:$0xff] %v1494
    %1528 = vst [vmem:[#allocation3 + $0xb8] sm:$0xff] %v1495
    %1529 = vst [vmem:[#allocation3 + $0xc0] sm:$0xff] %v1496
    %1530 = vst [vmem:[#allocation3 + $0xc8] sm:$0xff] %v1497
    %1531 = vst [vmem:[#allocation3 + $0xd0] sm:$0xff] %v1498
    %1532 = vst [vmem:[#allocation3 + $0xd8] sm:$0xff] %v1499
    %1533 = vst [vmem:[#allocation3 + $0xe0] sm:$0xff] %v1500
    %1534 = vst [vmem:[#allocation3 + $0xe8] sm:$0xff] %v1501
    %1535 = vst [vmem:[#allocation3 + $0xf0] sm:$0xff] %v1502
    %1536 = vst [vmem:[#allocation3 + $0xf8] sm:$0xff] %v1503
    %v1537 = vld [vmem:[#allocation2] sm:$0xff]
    %v1538 = vld [vmem:[#allocation2 + $0x8] sm:$0xff]
    %v1539 = vld [vmem:[#allocation2 + $0x10] sm:$0xff]
    %v1540 = vld [vmem:[#allocation2 + $0x18] sm:$0xff]
    %v1541 = vld [vmem:[#allocation2 + $0x20] sm:$0xff]
    %v1542 = vld [vmem:[#allocation2 + $0x28] sm:$0xff]
    %v1543 = vld [vmem:[#allocation2 + $0x30] sm:$0xff]
    %v1544 = vld [vmem:[#allocation2 + $0x38] sm:$0xff]
    %v1545 = vld [vmem:[#allocation2 + $0x40] sm:$0xff]
    %v1546 = vld [vmem:[#allocation2 + $0x48] sm:$0xff]
    %v1547 = vld [vmem:[#allocation2 + $0x50] sm:$0xff]
    %v1548 = vld [vmem:[#allocation2 + $0x58] sm:$0xff]
    %v1549 = vld [vmem:[#allocation2 + $0x60] sm:$0xff]
    %v1550 = vld [vmem:[#allocation2 + $0x68] sm:$0xff]
    %v1551 = vld [vmem:[#allocation2 + $0x70] sm:$0xff]
    %v1552 = vld [vmem:[#allocation2 + $0x78] sm:$0xff]
    %1553 = vst [vmem:[#allocation3 + $0x100] sm:$0xff] %v1537
    %1554 = vst [vmem:[#allocation3 + $0x108] sm:$0xff] %v1538
    %1555 = vst [vmem:[#allocation3 + $0x110] sm:$0xff] %v1539
    %1556 = vst [vmem:[#allocation3 + $0x118] sm:$0xff] %v1540
    %1557 = vst [vmem:[#allocation3 + $0x120] sm:$0xff] %v1541
    %1558 = vst [vmem:[#allocation3 + $0x128] sm:$0xff] %v1542
    %1559 = vst [vmem:[#allocation3 + $0x130] sm:$0xff] %v1543
    %1560 = vst [vmem:[#allocation3 + $0x138] sm:$0xff] %v1544
    %1561 = vst [vmem:[#allocation3 + $0x140] sm:$0xff] %v1545
    %1562 = vst [vmem:[#allocation3 + $0x148] sm:$0xff] %v1546
    %1563 = vst [vmem:[#allocation3 + $0x150] sm:$0xff] %v1547
    %1564 = vst [vmem:[#allocation3 + $0x158] sm:$0xff] %v1548
    %1565 = vst [vmem:[#allocation3 + $0x160] sm:$0xff] %v1549
    %1566 = vst [vmem:[#allocation3 + $0x168] sm:$0xff] %v1550
    %1567 = vst [vmem:[#allocation3 + $0x170] sm:$0xff] %v1551
    %1568 = vst [vmem:[#allocation3 + $0x178] sm:$0xff] %v1552
    %v1569 = vld [vmem:[%s2] sm:$0xff]
    %v1570 = vld [vmem:[#allocation3] sm:$0xff]
    %v1571 = vld [vmem:[#allocation3 + $0x8] sm:$0xff]
    %v1572 = vld [vmem:[#allocation3 + $0x10] sm:$0xff]
    %v1573 = vld [vmem:[#allocation3 + $0x18] sm:$0xff]
    %v1574 = vld [vmem:[#allocation3 + $0x20] sm:$0xff]
    %v1575 = vld [vmem:[#allocation3 + $0x28] sm:$0xff]
    %v1576 = vld [vmem:[#allocation3 + $0x30] sm:$0xff]
    %v1577 = vld [vmem:[#allocation3 + $0x38] sm:$0xff]
    %v1578 = vld [vmem:[#allocation3 + $0x40] sm:$0xff]
    %v1579 = vld [vmem:[#allocation3 + $0x48] sm:$0xff]
    %v1580 = vld [vmem:[#allocation3 + $0x50] sm:$0xff]
    %v1581 = vld [vmem:[#allocation3 + $0x58] sm:$0xff]
    %v1582 = vld [vmem:[#allocation3 + $0x60] sm:$0xff]
    %v1583 = vld [vmem:[#allocation3 + $0x68] sm:$0xff]
    %v1584 = vld [vmem:[#allocation3 + $0x70] sm:$0xff]
    %v1585 = vld [vmem:[#allocation3 + $0x78] sm:$0xff]
    %v1586 = vld [vmem:[#allocation3 + $0x80] sm:$0xff]
    %v1587 = vld [vmem:[#allocation3 + $0x88] sm:$0xff]
    %v1588 = vld [vmem:[#allocation3 + $0x90] sm:$0xff]
    %v1589 = vld [vmem:[#allocation3 + $0x98] sm:$0xff]
    %v1590 = vld [vmem:[#allocation3 + $0xa0] sm:$0xff]
    %v1591 = vld [vmem:[#allocation3 + $0xa8] sm:$0xff]
    %v1592 = vld [vmem:[#allocation3 + $0xb0] sm:$0xff]
    %v1593 = vld [vmem:[#allocation3 + $0xb8] sm:$0xff]
    %v1594 = vld [vmem:[#allocation3 + $0xc0] sm:$0xff]
    %v1595 = vld [vmem:[#allocation3 + $0xc8] sm:$0xff]
    %v1596 = vld [vmem:[#allocation3 + $0xd0] sm:$0xff]
    %v1597 = vld [vmem:[#allocation3 + $0xd8] sm:$0xff]
    %v1598 = vld [vmem:[#allocation3 + $0xe0] sm:$0xff]
    %v1599 = vld [vmem:[#allocation3 + $0xe8] sm:$0xff]
    %v1600 = vld [vmem:[#allocation3 + $0xf0] sm:$0xff]
    %v1601 = vld [vmem:[#allocation3 + $0xf8] sm:$0xff]
    %v1602 = vld [vmem:[#allocation3 + $0x100] sm:$0xff]
    %v1603 = vld [vmem:[#allocation3 + $0x108] sm:$0xff]
    %v1604 = vld [vmem:[#allocation3 + $0x110] sm:$0xff]
    %v1605 = vld [vmem:[#allocation3 + $0x118] sm:$0xff]
    %v1606 = vld [vmem:[#allocation3 + $0x120] sm:$0xff]
    %v1607 = vld [vmem:[#allocation3 + $0x128] sm:$0xff]
    %v1608 = vld [vmem:[#allocation3 + $0x130] sm:$0xff]
    %v1609 = vld [vmem:[#allocation3 + $0x138] sm:$0xff]
    %v1610 = vld [vmem:[#allocation3 + $0x140] sm:$0xff]
    %v1611 = vld [vmem:[#allocation3 + $0x148] sm:$0xff]
    %v1612 = vld [vmem:[#allocation3 + $0x150] sm:$0xff]
    %v1613 = vld [vmem:[#allocation3 + $0x158] sm:$0xff]
    %v1614 = vld [vmem:[#allocation3 + $0x160] sm:$0xff]
    %v1615 = vld [vmem:[#allocation3 + $0x168] sm:$0xff]
    %v1616 = vld [vmem:[#allocation3 + $0x170] sm:$0xff]
    %v1617 = vld [vmem:[#allocation3 + $0x178] sm:$0xff]
    %v1618 = vld [vmem:[%s4] sm:$0xff]
    %1620 = vset.pattern.permute.xlu0 0
    %1621 = vperm.xlu0 %1620, %v1618
    %v1622 = vpop.permute.xlu0 %1621
    %v1625 = vsel %vm660, %v1569, 0
    %1627 = vmatprep.subr.mxu0 %v1571
    %1628 = vmatpush1.msra.mxu0 %v1570
    %1629 = vmatprep.subr.mxu0 %v1587
    %1630 = vmatpush1.msra.mxu0 %v1586
    %1631 = vmatprep.subr.mxu0 %v1603
    %1632 = vmatpush1.msra.mxu0 %v1602
    %1633 = vmatprep.subr.mxu0 0.0
    %1634 = vmatpush1.msra.mxu0 0.0
    %1635 = vmatprep.subr.mxu0 0.0
    %1636 = vmatpush1.msra.mxu0 0.0
    %1637 = vmatprep.subr.mxu0 0.0
    %1638 = vmatpush1.msra.mxu0 0.0
    %1639 = vmatprep.subr.mxu0 0.0
    %1640 = vmatpush1.msra.mxu0 0.0
    %1641 = vmatprep.subr.mxu0 0.0
    %1642 = vmatpush1.msra.mxu0 0.0
    %1643 = vmatprep.subr.mxu0 0.0
    %1644 = vmatpush1.msra.mxu0 0.0
    %1645 = vmatprep.subr.mxu0 0.0
    %1646 = vmatpush1.msra.mxu0 0.0
    %1647 = vmatprep.subr.mxu0 0.0
    %1648 = vmatpush1.msra.mxu0 0.0
    %1649 = vmatprep.subr.mxu0 0.0
    %1650 = vmatpush1.msra.mxu0 0.0
    %1651 = vmatprep.subr.mxu0 0.0
    %1652 = vmatpush1.msra.mxu0 0.0
    %1653 = vmatprep.subr.mxu0 0.0
    %1654 = vmatpush1.msra.mxu0 0.0
    %1655 = vmatprep.subr.mxu0 0.0
    %1656 = vmatpush1.msra.mxu0 0.0
    %1657 = vmatprep.subr.mxu0 0.0
    %1658 = vmatpush1.msra.mxu0 0.0
    %1659 = vmatprep.subr.mxu0 0.0
    %1660 = vmatpush1.msra.mxu0 0.0
    %1661 = vmatprep.subr.mxu0 0.0
    %1662 = vmatpush1.msra.mxu0 0.0
    %1663 = vmatprep.subr.mxu0 0.0
    %1664 = vmatpush1.msra.mxu0 0.0
    %1665 = vmatprep.subr.mxu0 0.0
    %1666 = vmatpush1.msra.mxu0 0.0
    %1667 = vmatprep.subr.mxu0 0.0
    %1668 = vmatpush1.msra.mxu0 0.0
    %1669 = vmatprep.subr.mxu0 0.0
    %1670 = vmatpush1.msra.mxu0 0.0
    %1671 = vmatprep.subr.mxu0 0.0
    %1672 = vmatpush1.msra.mxu0 0.0
    %1673 = vmatprep.subr.mxu0 0.0
    %1674 = vmatpush1.msra.mxu0 0.0
    %1675 = vmatprep.subr.mxu0 0.0
    %1676 = vmatpush1.msra.mxu0 0.0
    %1677 = vmatprep.subr.mxu0 0.0
    %1678 = vmatpush1.msra.mxu0 0.0
    %1679 = vmatprep.subr.mxu0 0.0
    %1680 = vmatpush1.msra.mxu0 0.0
    %1681 = vmatprep.subr.mxu0 0.0
    %1682 = vmatpush1.msra.mxu0 0.0
    %1683 = vmatprep.subr.mxu0 0.0
    %1684 = vmatpush1.msra.mxu0 0.0
    %1685 = vmatprep.subr.mxu0 0.0
    %1686 = vmatpush1.msra.mxu0 0.0
    %1687 = vmatprep.subr.mxu0 0.0
    %1688 = vmatpush1.msra.mxu0 0.0
    %1689 = vmatprep.subr.mxu0 0.0
    %1690 = vmatpush1.msra.mxu0 0.0
    %1691 = vmatprep.mubr.f32.mxu0 0.0
    %1692 = vmatmul.mubr.f32.gmra.mrb[0].mxu0 %v1625
    %v1693 = vpop.f32.mrb[0].mxu0
    %v1694 = vpop.f32.mrb[0].mxu0
    %v1695 = vadd.f32 %v1622, %v1694
    %1696 = vdwg.mxu0
    %1697 = vmatprep.subr.mxu0 %v1573
    %1698 = vmatpush1.msra.mxu0 %v1572
    %1699 = vmatprep.subr.mxu0 %v1589
    %1700 = vmatpush1.msra.mxu0 %v1588
    %1701 = vmatprep.subr.mxu0 %v1605
    %1702 = vmatpush1.msra.mxu0 %v1604
    %1703 = vmatprep.subr.mxu0 0.0
    %1704 = vmatpush1.msra.mxu0 0.0
    %1705 = vmatprep.subr.mxu0 0.0
    %1706 = vmatpush1.msra.mxu0 0.0
    %1707 = vmatprep.subr.mxu0 0.0
    %1708 = vmatpush1.msra.mxu0 0.0
    %1709 = vmatprep.subr.mxu0 0.0
    %1710 = vmatpush1.msra.mxu0 0.0
    %1711 = vmatprep.subr.mxu0 0.0
    %1712 = vmatpush1.msra.mxu0 0.0
    %1713 = vmatprep.subr.mxu0 0.0
    %1714 = vmatpush1.msra.mxu0 0.0
    %1715 = vmatprep.subr.mxu0 0.0
    %1716 = vmatpush1.msra.mxu0 0.0
    %1717 = vmatprep.subr.mxu0 0.0
    %1718 = vmatpush1.msra.mxu0 0.0
    %1719 = vmatprep.subr.mxu0 0.0
    %1720 = vmatpush1.msra.mxu0 0.0
    %1721 = vmatprep.subr.mxu0 0.0
    %1722 = vmatpush1.msra.mxu0 0.0
    %1723 = vmatprep.subr.mxu0 0.0
    %1724 = vmatpush1.msra.mxu0 0.0
    %1725 = vmatprep.subr.mxu0 0.0
    %1726 = vmatpush1.msra.mxu0 0.0
    %1727 = vmatprep.subr.mxu0 0.0
    %1728 = vmatpush1.msra.mxu0 0.0
    %1729 = vmatprep.subr.mxu0 0.0
    %1730 = vmatpush1.msra.mxu0 0.0
    %1731 = vmatprep.subr.mxu0 0.0
    %1732 = vmatpush1.msra.mxu0 0.0
    %1733 = vmatprep.subr.mxu0 0.0
    %1734 = vmatpush1.msra.mxu0 0.0
    %1735 = vmatprep.subr.mxu0 0.0
    %1736 = vmatpush1.msra.mxu0 0.0
    %1737 = vmatprep.subr.mxu0 0.0
    %1738 = vmatpush1.msra.mxu0 0.0
    %1739 = vmatprep.subr.mxu0 0.0
    %1740 = vmatpush1.msra.mxu0 0.0
    %1741 = vmatprep.subr.mxu0 0.0
    %1742 = vmatpush1.msra.mxu0 0.0
    %1743 = vmatprep.subr.mxu0 0.0
    %1744 = vmatpush1.msra.mxu0 0.0
    %1745 = vmatprep.subr.mxu0 0.0
    %1746 = vmatpush1.msra.mxu0 0.0
    %1747 = vmatprep.subr.mxu0 0.0
    %1748 = vmatpush1.msra.mxu0 0.0
    %1749 = vmatprep.subr.mxu0 0.0
    %1750 = vmatpush1.msra.mxu0 0.0
    %1751 = vmatprep.subr.mxu0 0.0
    %1752 = vmatpush1.msra.mxu0 0.0
    %1753 = vmatprep.subr.mxu0 0.0
    %1754 = vmatpush1.msra.mxu0 0.0
    %1755 = vmatprep.subr.mxu0 0.0
    %1756 = vmatpush1.msra.mxu0 0.0
    %1757 = vmatprep.subr.mxu0 0.0
    %1758 = vmatpush1.msra.mxu0 0.0
    %1759 = vmatprep.subr.mxu0 0.0
    %1760 = vmatpush1.msra.mxu0 0.0
    %1761 = vmatprep.mubr.f32.mxu0 0.0
    %1762 = vmatmul.mubr.f32.gmra.mrb[0].mxu0 %v1625
    %v1763 = vpop.f32.mrb[0].mxu0
    %v1764 = vpop.f32.mrb[0].mxu0
    %v1765 = vadd.f32 %v1622, %v1764
    %1766 = vdwg.mxu0
    %1767 = vmatprep.subr.mxu0 %v1575
    %1768 = vmatpush1.msra.mxu0 %v1574
    %1769 = vmatprep.subr.mxu0 %v1591
    %1770 = vmatpush1.msra.mxu0 %v1590
    %1771 = vmatprep.subr.mxu0 %v1607
    %1772 = vmatpush1.msra.mxu0 %v1606
    %1773 = vmatprep.subr.mxu0 0.0
    %1774 = vmatpush1.msra.mxu0 0.0
    %1775 = vmatprep.subr.mxu0 0.0
    %1776 = vmatpush1.msra.mxu0 0.0
    %1777 = vmatprep.subr.mxu0 0.0
    %1778 = vmatpush1.msra.mxu0 0.0
    %1779 = vmatprep.subr.mxu0 0.0
    %1780 = vmatpush1.msra.mxu0 0.0
    %1781 = vmatprep.subr.mxu0 0.0
    %1782 = vmatpush1.msra.mxu0 0.0
    %1783 = vmatprep.subr.mxu0 0.0
    %1784 = vmatpush1.msra.mxu0 0.0
    %1785 = vmatprep.subr.mxu0 0.0
    %1786 = vmatpush1.msra.mxu0 0.0
    %1787 = vmatprep.subr.mxu0 0.0
    %1788 = vmatpush1.msra.mxu0 0.0
    %1789 = vmatprep.subr.mxu0 0.0
    %1790 = vmatpush1.msra.mxu0 0.0
    %1791 = vmatprep.subr.mxu0 0.0
    %1792 = vmatpush1.msra.mxu0 0.0
    %1793 = vmatprep.subr.mxu0 0.0
    %1794 = vmatpush1.msra.mxu0 0.0
    %1795 = vmatprep.subr.mxu0 0.0
    %1796 = vmatpush1.msra.mxu0 0.0
    %1797 = vmatprep.subr.mxu0 0.0
    %1798 = vmatpush1.msra.mxu0 0.0
    %1799 = vmatprep.subr.mxu0 0.0
    %1800 = vmatpush1.msra.mxu0 0.0
    %1801 = vmatprep.subr.mxu0 0.0
    %1802 = vmatpush1.msra.mxu0 0.0
    %1803 = vmatprep.subr.mxu0 0.0
    %1804 = vmatpush1.msra.mxu0 0.0
    %1805 = vmatprep.subr.mxu0 0.0
    %1806 = vmatpush1.msra.mxu0 0.0
    %1807 = vmatprep.subr.mxu0 0.0
    %1808 = vmatpush1.msra.mxu0 0.0
    %1809 = vmatprep.subr.mxu0 0.0
    %1810 = vmatpush1.msra.mxu0 0.0
    %1811 = vmatprep.subr.mxu0 0.0
    %1812 = vmatpush1.msra.mxu0 0.0
    %1813 = vmatprep.subr.mxu0 0.0
    %1814 = vmatpush1.msra.mxu0 0.0
    %1815 = vmatprep.subr.mxu0 0.0
    %1816 = vmatpush1.msra.mxu0 0.0
    %1817 = vmatprep.subr.mxu0 0.0
    %1818 = vmatpush1.msra.mxu0 0.0
    %1819 = vmatprep.subr.mxu0 0.0
    %1820 = vmatpush1.msra.mxu0 0.0
    %1821 = vmatprep.subr.mxu0 0.0
    %1822 = vmatpush1.msra.mxu0 0.0
    %1823 = vmatprep.subr.mxu0 0.0
    %1824 = vmatpush1.msra.mxu0 0.0
    %1825 = vmatprep.subr.mxu0 0.0
    %1826 = vmatpush1.msra.mxu0 0.0
    %1827 = vmatprep.subr.mxu0 0.0
    %1828 = vmatpush1.msra.mxu0 0.0
    %1829 = vmatprep.subr.mxu0 0.0
    %1830 = vmatpush1.msra.mxu0 0.0
    %1831 = vmatprep.mubr.f32.mxu0 0.0
    %1832 = vmatmul.mubr.f32.gmra.mrb[0].mxu0 %v1625
    %v1833 = vpop.f32.mrb[0].mxu0
    %v1834 = vpop.f32.mrb[0].mxu0
    %v1835 = vadd.f32 %v1622, %v1834
    %1836 = vdwg.mxu0
    %1837 = vmatprep.subr.mxu0 %v1577
    %1838 = vmatpush1.msra.mxu0 %v1576
    %1839 = vmatprep.subr.mxu0 %v1593
    %1840 = vmatpush1.msra.mxu0 %v1592
    %1841 = vmatprep.subr.mxu0 %v1609
    %1842 = vmatpush1.msra.mxu0 %v1608
    %1843 = vmatprep.subr.mxu0 0.0
    %1844 = vmatpush1.msra.mxu0 0.0
    %1845 = vmatprep.subr.mxu0 0.0
    %1846 = vmatpush1.msra.mxu0 0.0
    %1847 = vmatprep.subr.mxu0 0.0
    %1848 = vmatpush1.msra.mxu0 0.0
    %1849 = vmatprep.subr.mxu0 0.0
    %1850 = vmatpush1.msra.mxu0 0.0
    %1851 = vmatprep.subr.mxu0 0.0
    %1852 = vmatpush1.msra.mxu0 0.0
    %1853 = vmatprep.subr.mxu0 0.0
    %1854 = vmatpush1.msra.mxu0 0.0
    %1855 = vmatprep.subr.mxu0 0.0
    %1856 = vmatpush1.msra.mxu0 0.0
    %1857 = vmatprep.subr.mxu0 0.0
    %1858 = vmatpush1.msra.mxu0 0.0
    %1859 = vmatprep.subr.mxu0 0.0
    %1860 = vmatpush1.msra.mxu0 0.0
    %1861 = vmatprep.subr.mxu0 0.0
    %1862 = vmatpush1.msra.mxu0 0.0
    %1863 = vmatprep.subr.mxu0 0.0
    %1864 = vmatpush1.msra.mxu0 0.0
    %1865 = vmatprep.subr.mxu0 0.0
    %1866 = vmatpush1.msra.mxu0 0.0
    %1867 = vmatprep.subr.mxu0 0.0
    %1868 = vmatpush1.msra.mxu0 0.0
    %1869 = vmatprep.subr.mxu0 0.0
    %1870 = vmatpush1.msra.mxu0 0.0
    %1871 = vmatprep.subr.mxu0 0.0
    %1872 = vmatpush1.msra.mxu0 0.0
    %1873 = vmatprep.subr.mxu0 0.0
    %1874 = vmatpush1.msra.mxu0 0.0
    %1875 = vmatprep.subr.mxu0 0.0
    %1876 = vmatpush1.msra.mxu0 0.0
    %1877 = vmatprep.subr.mxu0 0.0
    %1878 = vmatpush1.msra.mxu0 0.0
    %1879 = vmatprep.subr.mxu0 0.0
    %1880 = vmatpush1.msra.mxu0 0.0
    %1881 = vmatprep.subr.mxu0 0.0
    %1882 = vmatpush1.msra.mxu0 0.0
    %1883 = vmatprep.subr.mxu0 0.0
    %1884 = vmatpush1.msra.mxu0 0.0
    %1885 = vmatprep.subr.mxu0 0.0
    %1886 = vmatpush1.msra.mxu0 0.0
    %1887 = vmatprep.subr.mxu0 0.0
    %1888 = vmatpush1.msra.mxu0 0.0
    %1889 = vmatprep.subr.mxu0 0.0
    %1890 = vmatpush1.msra.mxu0 0.0
    %1891 = vmatprep.subr.mxu0 0.0
    %1892 = vmatpush1.msra.mxu0 0.0
    %1893 = vmatprep.subr.mxu0 0.0
    %1894 = vmatpush1.msra.mxu0 0.0
    %1895 = vmatprep.subr.mxu0 0.0
    %1896 = vmatpush1.msra.mxu0 0.0
    %1897 = vmatprep.subr.mxu0 0.0
    %1898 = vmatpush1.msra.mxu0 0.0
    %1899 = vmatprep.subr.mxu0 0.0
    %1900 = vmatpush1.msra.mxu0 0.0
    %1901 = vmatprep.mubr.f32.mxu0 0.0
    %1902 = vmatmul.mubr.f32.gmra.mrb[0].mxu0 %v1625
    %v1903 = vpop.f32.mrb[0].mxu0
    %v1904 = vpop.f32.mrb[0].mxu0
    %v1905 = vadd.f32 %v1622, %v1904
    %1906 = vdwg.mxu0
    %1907 = vmatprep.subr.mxu0 %v1579
    %1908 = vmatpush1.msra.mxu0 %v1578
    %1909 = vmatprep.subr.mxu0 %v1595
    %1910 = vmatpush1.msra.mxu0 %v1594
    %1911 = vmatprep.subr.mxu0 %v1611
    %1912 = vmatpush1.msra.mxu0 %v1610
    %1913 = vmatprep.subr.mxu0 0.0
    %1914 = vmatpush1.msra.mxu0 0.0
    %1915 = vmatprep.subr.mxu0 0.0
    %1916 = vmatpush1.msra.mxu0 0.0
    %1917 = vmatprep.subr.mxu0 0.0
    %1918 = vmatpush1.msra.mxu0 0.0
    %1919 = vmatprep.subr.mxu0 0.0
    %1920 = vmatpush1.msra.mxu0 0.0
    %1921 = vmatprep.subr.mxu0 0.0
    %1922 = vmatpush1.msra.mxu0 0.0
    %1923 = vmatprep.subr.mxu0 0.0
    %1924 = vmatpush1.msra.mxu0 0.0
    %1925 = vmatprep.subr.mxu0 0.0
    %1926 = vmatpush1.msra.mxu0 0.0
    %1927 = vmatprep.subr.mxu0 0.0
    %1928 = vmatpush1.msra.mxu0 0.0
    %1929 = vmatprep.subr.mxu0 0.0
    %1930 = vmatpush1.msra.mxu0 0.0
    %1931 = vmatprep.subr.mxu0 0.0
    %1932 = vmatpush1.msra.mxu0 0.0
    %1933 = vmatprep.subr.mxu0 0.0
    %1934 = vmatpush1.msra.mxu0 0.0
    %1935 = vmatprep.subr.mxu0 0.0
    %1936 = vmatpush1.msra.mxu0 0.0
    %1937 = vmatprep.subr.mxu0 0.0
    %1938 = vmatpush1.msra.mxu0 0.0
    %1939 = vmatprep.subr.mxu0 0.0
    %1940 = vmatpush1.msra.mxu0 0.0
    %1941 = vmatprep.subr.mxu0 0.0
    %1942 = vmatpush1.msra.mxu0 0.0
    %1943 = vmatprep.subr.mxu0 0.0
    %1944 = vmatpush1.msra.mxu0 0.0
    %1945 = vmatprep.subr.mxu0 0.0
    %1946 = vmatpush1.msra.mxu0 0.0
    %1947 = vmatprep.subr.mxu0 0.0
    %1948 = vmatpush1.msra.mxu0 0.0
    %1949 = vmatprep.subr.mxu0 0.0
    %1950 = vmatpush1.msra.mxu0 0.0
    %1951 = vmatprep.subr.mxu0 0.0
    %1952 = vmatpush1.msra.mxu0 0.0
    %1953 = vmatprep.subr.mxu0 0.0
    %1954 = vmatpush1.msra.mxu0 0.0
    %1955 = vmatprep.subr.mxu0 0.0
    %1956 = vmatpush1.msra.mxu0 0.0
    %1957 = vmatprep.subr.mxu0 0.0
    %1958 = vmatpush1.msra.mxu0 0.0
    %1959 = vmatprep.subr.mxu0 0.0
    %1960 = vmatpush1.msra.mxu0 0.0
    %1961 = vmatprep.subr.mxu0 0.0
    %1962 = vmatpush1.msra.mxu0 0.0
    %1963 = vmatprep.subr.mxu0 0.0
    %1964 = vmatpush1.msra.mxu0 0.0
    %1965 = vmatprep.subr.mxu0 0.0
    %1966 = vmatpush1.msra.mxu0 0.0
    %1967 = vmatprep.subr.mxu0 0.0
    %1968 = vmatpush1.msra.mxu0 0.0
    %1969 = vmatprep.subr.mxu0 0.0
    %1970 = vmatpush1.msra.mxu0 0.0
    %1971 = vmatprep.mubr.f32.mxu0 0.0
    %1972 = vmatmul.mubr.f32.gmra.mrb[0].mxu0 %v1625
    %v1973 = vpop.f32.mrb[0].mxu0
    %v1974 = vpop.f32.mrb[0].mxu0
    %v1975 = vadd.f32 %v1622, %v1974
    %1976 = vdwg.mxu0
    %1977 = vmatprep.subr.mxu0 %v1581
    %1978 = vmatpush1.msra.mxu0 %v1580
    %1979 = vmatprep.subr.mxu0 %v1597
    %1980 = vmatpush1.msra.mxu0 %v1596
    %1981 = vmatprep.subr.mxu0 %v1613
    %1982 = vmatpush1.msra.mxu0 %v1612
    %1983 = vmatprep.subr.mxu0 0.0
    %1984 = vmatpush1.msra.mxu0 0.0
    %1985 = vmatprep.subr.mxu0 0.0
    %1986 = vmatpush1.msra.mxu0 0.0
    %1987 = vmatprep.subr.mxu0 0.0
    %1988 = vmatpush1.msra.mxu0 0.0
    %1989 = vmatprep.subr.mxu0 0.0
    %1990 = vmatpush1.msra.mxu0 0.0
    %1991 = vmatprep.subr.mxu0 0.0
    %1992 = vmatpush1.msra.mxu0 0.0
    %1993 = vmatprep.subr.mxu0 0.0
    %1994 = vmatpush1.msra.mxu0 0.0
    %1995 = vmatprep.subr.mxu0 0.0
    %1996 = vmatpush1.msra.mxu0 0.0
    %1997 = vmatprep.subr.mxu0 0.0
    %1998 = vmatpush1.msra.mxu0 0.0
    %1999 = vmatprep.subr.mxu0 0.0
    %2000 = vmatpush1.msra.mxu0 0.0
    %2001 = vmatprep.subr.mxu0 0.0
    %2002 = vmatpush1.msra.mxu0 0.0
    %2003 = vmatprep.subr.mxu0 0.0
    %2004 = vmatpush1.msra.mxu0 0.0
    %2005 = vmatprep.subr.mxu0 0.0
    %2006 = vmatpush1.msra.mxu0 0.0
    %2007 = vmatprep.subr.mxu0 0.0
    %2008 = vmatpush1.msra.mxu0 0.0
    %2009 = vmatprep.subr.mxu0 0.0
    %2010 = vmatpush1.msra.mxu0 0.0
    %2011 = vmatprep.subr.mxu0 0.0
    %2012 = vmatpush1.msra.mxu0 0.0
    %2013 = vmatprep.subr.mxu0 0.0
    %2014 = vmatpush1.msra.mxu0 0.0
    %2015 = vmatprep.subr.mxu0 0.0
    %2016 = vmatpush1.msra.mxu0 0.0
    %2017 = vmatprep.subr.mxu0 0.0
    %2018 = vmatpush1.msra.mxu0 0.0
    %2019 = vmatprep.subr.mxu0 0.0
    %2020 = vmatpush1.msra.mxu0 0.0
    %2021 = vmatprep.subr.mxu0 0.0
    %2022 = vmatpush1.msra.mxu0 0.0
    %2023 = vmatprep.subr.mxu0 0.0
    %2024 = vmatpush1.msra.mxu0 0.0
    %2025 = vmatprep.subr.mxu0 0.0
    %2026 = vmatpush1.msra.mxu0 0.0
    %2027 = vmatprep.subr.mxu0 0.0
    %2028 = vmatpush1.msra.mxu0 0.0
    %2029 = vmatprep.subr.mxu0 0.0
    %2030 = vmatpush1.msra.mxu0 0.0
    %2031 = vmatprep.subr.mxu0 0.0
    %2032 = vmatpush1.msra.mxu0 0.0
    %2033 = vmatprep.subr.mxu0 0.0
    %2034 = vmatpush1.msra.mxu0 0.0
    %2035 = vmatprep.subr.mxu0 0.0
    %2036 = vmatpush1.msra.mxu0 0.0
    %2037 = vmatprep.subr.mxu0 0.0
    %2038 = vmatpush1.msra.mxu0 0.0
    %2039 = vmatprep.subr.mxu0 0.0
    %2040 = vmatpush1.msra.mxu0 0.0
    %2041 = vmatprep.mubr.f32.mxu0 0.0
    %2042 = vmatmul.mubr.f32.gmra.mrb[0].mxu0 %v1625
    %v2043 = vpop.f32.mrb[0].mxu0
    %v2044 = vpop.f32.mrb[0].mxu0
    %v2045 = vadd.f32 %v1622, %v2044
    %2046 = vdwg.mxu0
    %2047 = vmatprep.subr.mxu0 %v1583
    %2048 = vmatpush1.msra.mxu0 %v1582
    %2049 = vmatprep.subr.mxu0 %v1599
    %2050 = vmatpush1.msra.mxu0 %v1598
    %2051 = vmatprep.subr.mxu0 %v1615
    %2052 = vmatpush1.msra.mxu0 %v1614
    %2053 = vmatprep.subr.mxu0 0.0
    %2054 = vmatpush1.msra.mxu0 0.0
    %2055 = vmatprep.subr.mxu0 0.0
    %2056 = vmatpush1.msra.mxu0 0.0
    %2057 = vmatprep.subr.mxu0 0.0
    %2058 = vmatpush1.msra.mxu0 0.0
    %2059 = vmatprep.subr.mxu0 0.0
    %2060 = vmatpush1.msra.mxu0 0.0
    %2061 = vmatprep.subr.mxu0 0.0
    %2062 = vmatpush1.msra.mxu0 0.0
    %2063 = vmatprep.subr.mxu0 0.0
    %2064 = vmatpush1.msra.mxu0 0.0
    %2065 = vmatprep.subr.mxu0 0.0
    %2066 = vmatpush1.msra.mxu0 0.0
    %2067 = vmatprep.subr.mxu0 0.0
    %2068 = vmatpush1.msra.mxu0 0.0
    %2069 = vmatprep.subr.mxu0 0.0
    %2070 = vmatpush1.msra.mxu0 0.0
    %2071 = vmatprep.subr.mxu0 0.0
    %2072 = vmatpush1.msra.mxu0 0.0
    %2073 = vmatprep.subr.mxu0 0.0
    %2074 = vmatpush1.msra.mxu0 0.0
    %2075 = vmatprep.subr.mxu0 0.0
    %2076 = vmatpush1.msra.mxu0 0.0
    %2077 = vmatprep.subr.mxu0 0.0
    %2078 = vmatpush1.msra.mxu0 0.0
    %2079 = vmatprep.subr.mxu0 0.0
    %2080 = vmatpush1.msra.mxu0 0.0
    %2081 = vmatprep.subr.mxu0 0.0
    %2082 = vmatpush1.msra.mxu0 0.0
    %2083 = vmatprep.subr.mxu0 0.0
    %2084 = vmatpush1.msra.mxu0 0.0
    %2085 = vmatprep.subr.mxu0 0.0
    %2086 = vmatpush1.msra.mxu0 0.0
    %2087 = vmatprep.subr.mxu0 0.0
    %2088 = vmatpush1.msra.mxu0 0.0
    %2089 = vmatprep.subr.mxu0 0.0
    %2090 = vmatpush1.msra.mxu0 0.0
    %2091 = vmatprep.subr.mxu0 0.0
    %2092 = vmatpush1.msra.mxu0 0.0
    %2093 = vmatprep.subr.mxu0 0.0
    %2094 = vmatpush1.msra.mxu0 0.0
    %2095 = vmatprep.subr.mxu0 0.0
    %2096 = vmatpush1.msra.mxu0 0.0
    %2097 = vmatprep.subr.mxu0 0.0
    %2098 = vmatpush1.msra.mxu0 0.0
    %2099 = vmatprep.subr.mxu0 0.0
    %2100 = vmatpush1.msra.mxu0 0.0
    %2101 = vmatprep.subr.mxu0 0.0
    %2102 = vmatpush1.msra.mxu0 0.0
    %2103 = vmatprep.subr.mxu0 0.0
    %2104 = vmatpush1.msra.mxu0 0.0
    %2105 = vmatprep.subr.mxu0 0.0
    %2106 = vmatpush1.msra.mxu0 0.0
    %2107 = vmatprep.subr.mxu0 0.0
    %2108 = vmatpush1.msra.mxu0 0.0
    %2109 = vmatprep.subr.mxu0 0.0
    %2110 = vmatpush1.msra.mxu0 0.0
    %2111 = vmatprep.mubr.f32.mxu0 0.0
    %2112 = vmatmul.mubr.f32.gmra.mrb[0].mxu0 %v1625
    %v2113 = vpop.f32.mrb[0].mxu0
    %v2114 = vpop.f32.mrb[0].mxu0
    %v2115 = vadd.f32 %v1622, %v2114
    %2116 = vdwg.mxu0
    %2117 = vmatprep.subr.mxu0 %v1585
    %2118 = vmatpush1.msra.mxu0 %v1584
    %2119 = vmatprep.subr.mxu0 %v1601
    %2120 = vmatpush1.msra.mxu0 %v1600
    %2121 = vmatprep.subr.mxu0 %v1617
    %2122 = vmatpush1.msra.mxu0 %v1616
    %2123 = vmatprep.subr.mxu0 0.0
    %2124 = vmatpush1.msra.mxu0 0.0
    %2125 = vmatprep.subr.mxu0 0.0
    %2126 = vmatpush1.msra.mxu0 0.0
    %2127 = vmatprep.subr.mxu0 0.0
    %2128 = vmatpush1.msra.mxu0 0.0
    %2129 = vmatprep.subr.mxu0 0.0
    %2130 = vmatpush1.msra.mxu0 0.0
    %2131 = vmatprep.subr.mxu0 0.0
    %2132 = vmatpush1.msra.mxu0 0.0
    %2133 = vmatprep.subr.mxu0 0.0
    %2134 = vmatpush1.msra.mxu0 0.0
    %2135 = vmatprep.subr.mxu0 0.0
    %2136 = vmatpush1.msra.mxu0 0.0
    %2137 = vmatprep.subr.mxu0 0.0
    %2138 = vmatpush1.msra.mxu0 0.0
    %2139 = vmatprep.subr.mxu0 0.0
    %2140 = vmatpush1.msra.mxu0 0.0
    %2141 = vmatprep.subr.mxu0 0.0
    %2142 = vmatpush1.msra.mxu0 0.0
    %2143 = vmatprep.subr.mxu0 0.0
    %2144 = vmatpush1.msra.mxu0 0.0
    %2145 = vmatprep.subr.mxu0 0.0
    %2146 = vmatpush1.msra.mxu0 0.0
    %2147 = vmatprep.subr.mxu0 0.0
    %2148 = vmatpush1.msra.mxu0 0.0
    %2149 = vmatprep.subr.mxu0 0.0
    %2150 = vmatpush1.msra.mxu0 0.0
    %2151 = vmatprep.subr.mxu0 0.0
    %2152 = vmatpush1.msra.mxu0 0.0
    %2153 = vmatprep.subr.mxu0 0.0
    %2154 = vmatpush1.msra.mxu0 0.0
    %2155 = vmatprep.subr.mxu0 0.0
    %2156 = vmatpush1.msra.mxu0 0.0
    %2157 = vmatprep.subr.mxu0 0.0
    %2158 = vmatpush1.msra.mxu0 0.0
    %2159 = vmatprep.subr.mxu0 0.0
    %2160 = vmatpush1.msra.mxu0 0.0
    %2161 = vmatprep.subr.mxu0 0.0
    %2162 = vmatpush1.msra.mxu0 0.0
    %2163 = vmatprep.subr.mxu0 0.0
    %2164 = vmatpush1.msra.mxu0 0.0
    %2165 = vmatprep.subr.mxu0 0.0
    %2166 = vmatpush1.msra.mxu0 0.0
    %2167 = vmatprep.subr.mxu0 0.0
    %2168 = vmatpush1.msra.mxu0 0.0
    %2169 = vmatprep.subr.mxu0 0.0
    %2170 = vmatpush1.msra.mxu0 0.0
    %2171 = vmatprep.subr.mxu0 0.0
    %2172 = vmatpush1.msra.mxu0 0.0
    %2173 = vmatprep.subr.mxu0 0.0
    %2174 = vmatpush1.msra.mxu0 0.0
    %2175 = vmatprep.subr.mxu0 0.0
    %2176 = vmatpush1.msra.mxu0 0.0
    %2177 = vmatprep.subr.mxu0 0.0
    %2178 = vmatpush1.msra.mxu0 0.0
    %2179 = vmatprep.subr.mxu0 0.0
    %2180 = vmatpush1.msra.mxu0 0.0
    %2181 = vmatprep.mubr.f32.mxu0 0.0
    %2182 = vmatmul.mubr.f32.gmra.mrb[0].mxu0 %v1625
    %v2183 = vpop.f32.mrb[0].mxu0
    %v2184 = vpop.f32.mrb[0].mxu0
    %v2185 = vadd.f32 %v1622, %v2184
    %2186 = vdwg.mxu0
    %v2187 = vmax.f32 %v1695, 0.0
    %v2188 = vmax.f32 %v1765, 0.0
    %v2189 = vmax.f32 %v1835, 0.0
    %v2190 = vmax.f32 %v1905, 0.0
    %v2191 = vmax.f32 %v1975, 0.0
    %v2192 = vmax.f32 %v2045, 0.0
    %v2193 = vmax.f32 %v2115, 0.0
    %v2194 = vmax.f32 %v2185, 0.0
    %v2195 = vrot.slane %v2187, 4
    %v2196 = vmax.f32 %v2187, %v2195
    %v2197 = vrot.slane %v2196, 2
    %v2198 = vmax.f32 %v2196, %v2197
    %v2199 = vrot.slane %v2198, 1
    %v2200 = vmax.f32 %v2198, %v2199
    %v2201 = vrot.slane %v2188, 4
    %v2202 = vmax.f32 %v2188, %v2201
    %v2203 = vrot.slane %v2202, 2
    %v2204 = vmax.f32 %v2202, %v2203
    %v2205 = vrot.slane %v2204, 1
    %v2206 = vmax.f32 %v2204, %v2205
    %v2207 = vrot.slane %v2189, 4
    %v2208 = vmax.f32 %v2189, %v2207
    %v2209 = vrot.slane %v2208, 2
    %v2210 = vmax.f32 %v2208, %v2209
    %v2211 = vrot.slane %v2210, 1
    %v2212 = vmax.f32 %v2210, %v2211
    %v2213 = vrot.slane %v2190, 4
    %v2214 = vmax.f32 %v2190, %v2213
    %v2215 = vrot.slane %v2214, 2
    %v2216 = vmax.f32 %v2214, %v2215
    %v2217 = vrot.slane %v2216, 1
    %v2218 = vmax.f32 %v2216, %v2217
    %v2219 = vrot.slane %v2191, 4
    %v2220 = vmax.f32 %v2191, %v2219
    %v2221 = vrot.slane %v2220, 2
    %v2222 = vmax.f32 %v2220, %v2221
    %v2223 = vrot.slane %v2222, 1
    %v2224 = vmax.f32 %v2222, %v2223
    %v2225 = vrot.slane %v2192, 4
    %v2226 = vmax.f32 %v2192, %v2225
    %v2227 = vrot.slane %v2226, 2
    %v2228 = vmax.f32 %v2226, %v2227
    %v2229 = vrot.slane %v2228, 1
    %v2230 = vmax.f32 %v2228, %v2229
    %v2231 = vrot.slane %v2193, 4
    %v2232 = vmax.f32 %v2193, %v2231
    %v2233 = vrot.slane %v2232, 2
    %v2234 = vmax.f32 %v2232, %v2233
    %v2235 = vrot.slane %v2234, 1
    %v2236 = vmax.f32 %v2234, %v2235
    %v2237 = vrot.slane %v2194, 4
    %v2238 = vmax.f32 %v2194, %v2237
    %v2239 = vrot.slane %v2238, 2
    %v2240 = vmax.f32 %v2238, %v2239
    %v2241 = vrot.slane %v2240, 1
    %v2242 = vmax.f32 %v2240, %v2241
    %2243 = vst [vmem:[#allocation7] sm:$0x1] %v2200
    %2244 = vst [vmem:[#allocation7 + $0x1] sm:$0x1] %v2206
    %2245 = vst [vmem:[#allocation7 + $0x2] sm:$0x1] %v2212
    %2246 = vst [vmem:[#allocation7 + $0x3] sm:$0x1] %v2218
    %2247 = vst [vmem:[#allocation7 + $0x4] sm:$0x1] %v2224
    %2248 = vst [vmem:[#allocation7 + $0x5] sm:$0x1] %v2230
    %2249 = vst [vmem:[#allocation7 + $0x6] sm:$0x1] %v2236
    %2250 = vst [vmem:[#allocation7 + $0x7] sm:$0x1] %v2242
    // Predicated region
    $region26: #{tpu_custom_call.1} parent=1 // pred_check
      _
    $region27: #{tpu_custom_call.1} parent=1 // pred_check_branch
      %2252 = sbr.rel (0) target = $region29
    $region28: #{tpu_custom_call.1} parent=1 // pred_region
      %s2254 = ssub.s32 128, 128
      %2255 = vsyncadd [#allocation6], %s2254
      %s2257 = sshll.u32 [#allocation7], 4
      %s2258 = int_to_ptr.vmem [resolvable:$true] %s2257
      %2260 = dma.vmem_to_hbm [thread:$0]  %s2258, 128, %s5, [#allocation6]
    $region29: #{tpu_custom_call.1} parent=1 // pred_fallthru
      _
    // Predicated region
    $region30: #{tpu_custom_call.1} parent=1 // pred_check
      _
    $region31: #{tpu_custom_call.1} parent=1 // pred_check_branch
      %2262 = sbr.rel (0) target = $region33
    $region32: #{tpu_custom_call.1} parent=1 // pred_region
      %2263 = dma.done [#allocation6], 128
    $region33: #{tpu_custom_call.1} parent=1 // pred_fallthru
      _
    %2264 = vsyncpa [#allocation5], 1
    %2265 = vsyncpa [#allocation6], 1

</llo_original>
